<compile_context>
chip_gen: v7x
topology: tpu7x:2x2x1
jax: 0.10.0
libtpu: 0.0.40
codegen_flags: <defaults>
</compile_context>

<pallas_src>
import jax
import jax.numpy as jnp
from jax.experimental import pallas as pl
from jax.experimental.pallas import tpu as pltpu

HIDDEN = 64            # hidden_size (module's hidden_size = 64)
H_PAD = 128            # per-gate lane padding (multiple of 128)
G3 = 3 * H_PAD         # fused gate width (r,z,n), lane-dense
VOCAB = 16             # input_size (embedding rows), small synthetic vocab


# ---------------------------------------------------------------------------
# Kernel: full sequence (embedding gather + hoisted input proj + recurrence)
# ---------------------------------------------------------------------------
def gru_seq_kernel(tok_ref,     # SMEM scalar prefetch: (T,) int32 token ids
                   emb_ref,     # (VOCAB, 64)   embedding table, VMEM-resident
                   h0_ref,      # (1, 128)      initial hidden (lanes 64:127 zero)
                   wih_ref,     # (64, 384)     fused W_ih^T  (gate order r,z,n)
                   whh_ref,     # (64, 384)     fused W_hh^T
                   bi_ref,      # (1, 384)      [b_ir+b_hr, b_iz+b_hz, b_in]
                   bh_ref,      # (1, 384)      [0,         0,         b_hn]
                   out_ref,     # (T_pad, 128)  per-step hidden states (== outputs)
                   x_scr,       # VMEM (T_pad, 64)   gathered embeddings
                   gi_scr):     # VMEM (T_pad, 384)  hoisted input projection
    seq_len = tok_ref.shape[0]          # logical token count (static)
    n_rows = out_ref.shape[0]           # sublane-padded row count (static)

    if n_rows != seq_len:               # trace-time branch: deterministic pad rows
        out_ref[...] = jnp.zeros_like(out_ref)
        x_scr[...] = jnp.zeros_like(x_scr)

    # 1) Embedding gather: all T rows into a sublane-dense LHS.
    # TODO(synk): for a realistic vocab, gather rows from an HBM (pl.ANY) ref
    # with double-buffered make_async_copy instead of a VMEM-resident table.
    for t in range(seq_len):
        x_scr[pl.ds(t, 1), :] = emb_ref[pl.ds(tok_ref[t], 1), :]

    # 2) Hoisted input projection: one (T,64)x(64,384) MXU matmul (off the
    #    serial critical path).
    gi_scr[...] = (jnp.dot(x_scr[...], wih_ref[...],
                           preferred_element_type=jnp.float32) + bi_ref[...])

    # 3) Serial recurrence; hidden state lives in vregs (loop carry).
    # TODO(synk): if the bundle dump shows the loop-invariant W_hh push is not
    # hoisted by Mosaic, drive the MXU with matmul_push_rhs/matmul_acc_lhs.
    whh = whh_ref[...]                                       # hoisted loads
    bh = bh_ref[...]
    h = h0_ref[...]                                          # (1, 128)
    for t in range(seq_len):                                 # static unroll
        gi = gi_scr[pl.ds(t, 1), :]                          # (1, 384)
        gh = jnp.dot(h[:, :HIDDEN], whh,                     # real K = 64
                     preferred_element_type=jnp.float32) + bh
        rz = jax.nn.sigmoid(gi[:, :2 * H_PAD] + gh[:, :2 * H_PAD])
        r = rz[:, :H_PAD]
        z = rz[:, H_PAD:]
        n = jnp.tanh(gi[:, 2 * H_PAD:] + r * gh[:, 2 * H_PAD:])
        h = (1.0 - z) * n + z * h                            # PyTorch GRU update
        out_ref[pl.ds(t, 1), :] = h                          # lane-dense row store


# ---------------------------------------------------------------------------
# Parameter construction (PyTorch layout) and packing into the kernel layout
# ---------------------------------------------------------------------------
def init_params(key, vocab=VOCAB, hidden=HIDDEN):
    """Raw parameters with nn.Embedding + nn.GRU shapes (gate order r,z,n)."""
    k_emb, k_wih, k_whh, k_bih, k_bhh = jax.random.split(key, 5)
    bound = 1.0 / (hidden ** 0.5)
    emb = jax.random.normal(k_emb, (vocab, hidden), jnp.float32)
    w_ih = jax.random.uniform(k_wih, (3 * hidden, hidden), jnp.float32, -bound, bound)
    w_hh = jax.random.uniform(k_whh, (3 * hidden, hidden), jnp.float32, -bound, bound)
    b_ih = jax.random.uniform(k_bih, (3 * hidden,), jnp.float32, -bound, bound)
    b_hh = jax.random.uniform(k_bhh, (3 * hidden,), jnp.float32, -bound, bound)
    return emb, w_ih, w_hh, b_ih, b_hh


def pack_params(emb, w_ih, w_hh, b_ih, b_hh, hidden=HIDDEN, hp=H_PAD):
    """Fuse/transpose gate weights: real K=hidden, per-gate lanes padded to hp."""
    def fuse(w):  # (3H, H) PyTorch layout -> (H, 3*hp); x @ fused == x @ W_g^T per gate
        out = jnp.zeros((hidden, 3 * hp), jnp.float32)
        for g in range(3):
            wg = w[g * hidden:(g + 1) * hidden, :]           # (H, H)
            out = out.at[:, g * hp:g * hp + hidden].set(wg.T)
        return out

    wih_f = fuse(w_ih)
    whh_f = fuse(w_hh)

    bi = jnp.zeros((1, 3 * hp), jnp.float32)
    bh = jnp.zeros((1, 3 * hp), jnp.float32)
    for g in range(2):  # r, z biases folded (b_ih + b_hh)
        folded = b_ih[g * hidden:(g + 1) * hidden] + b_hh[g * hidden:(g + 1) * hidden]
        bi = bi.at[0, g * hp:g * hp + hidden].set(folded)
    bi = bi.at[0, 2 * hp:2 * hp + hidden].set(b_ih[2 * hidden:3 * hidden])   # b_in
    bh = bh.at[0, 2 * hp:2 * hp + hidden].set(b_hh[2 * hidden:3 * hidden])   # b_hn
    return emb.astype(jnp.float32), wih_f, whh_f, bi, bh


# ---------------------------------------------------------------------------
# Wrappers
# ---------------------------------------------------------------------------
def encoder_rnn_sequence(tokens, hidden0, packed, hidden=HIDDEN, hp=H_PAD):
    """Run EncoderRNN.forward once per token, all inside one pallas_call.

    tokens: (T,) int32; hidden0: (1,1,H).
    Returns (outputs (T,1,1,H), final hidden (1,1,H))."""
    emb, wih_f, whh_f, bi, bh = packed
    tokens = tokens.astype(jnp.int32)
    T = int(tokens.shape[0])
    T_pad = ((T + 7) // 8) * 8                        # sublane-aligned row count
    vocab = emb.shape[0]
    h0 = jnp.zeros((1, hp), jnp.float32).at[:, :hidden].set(hidden0.reshape(1, hidden))

    const = lambda shape: pl.BlockSpec(shape, lambda i, tok: (0,) * len(shape))
    out = pl.pallas_call(
        gru_seq_kernel,
        out_shape=jax.ShapeDtypeStruct((T_pad, hp), jnp.float32),
        grid_spec=pltpu.PrefetchScalarGridSpec(
            num_scalar_prefetch=1,
            grid=(1,),                                # single step; loop is in-kernel
            in_specs=[
                const((vocab, hidden)),               # embedding table (resident)
                const((1, hp)),                       # initial hidden
                const((hidden, 3 * hp)),              # fused W_ih^T (real K=64)
                const((hidden, 3 * hp)),              # fused W_hh^T (real K=64)
                const((1, 3 * hp)),                   # folded input bias
                const((1, 3 * hp)),                   # hidden n-gate bias
            ],
            out_specs=pl.BlockSpec((T_pad, hp), lambda i, tok: (0, 0)),
            scratch_shapes=[pltpu.VMEM((T_pad, hidden), jnp.float32),
                            pltpu.VMEM((T_pad, 3 * hp), jnp.float32)],
        ),
        compiler_params=pltpu.CompilerParams(
            dimension_semantics=("arbitrary",)),
    )(tokens, emb, h0, wih_f, whh_f, bi, bh)

    outs = out[:T, :hidden]                           # (T, H) logical lanes
    outputs = outs.reshape(T, 1, 1, hidden)           # per-step module outputs
    hidden_final = outs[T - 1].reshape(1, 1, hidden)
    return outputs, hidden_final


def encoder_rnn_forward(token, hidden, packed):
    """Exact EncoderRNN.forward: one token (shape (1,) int32), hidden (1,1,H)."""
    outputs, hfinal = encoder_rnn_sequence(token.reshape(1).astype(jnp.int32),
                                           hidden, packed)
    return outputs[0], hfinal                         # both (1, 1, H)


# ---------------------------------------------------------------------------
# Pure-JAX reference (PyTorch GRU equations, raw parameter layout)
# ---------------------------------------------------------------------------
def _gru_cell_ref(x, h, w_ih, w_hh, b_ih, b_hh):
    gi = x @ w_ih.T + b_ih
    gh = h @ w_hh.T + b_hh
    i_r, i_z, i_n = jnp.split(gi, 3, axis=1)
    h_r, h_z, h_n = jnp.split(gh, 3, axis=1)
    r = jax.nn.sigmoid(i_r + h_r)
    z = jax.nn.sigmoid(i_z + h_z)
    n = jnp.tanh(i_n + r * h_n)
    return (1.0 - z) * n + z * h


def encoder_rnn_reference(tokens, hidden0, raw, hidden=HIDDEN):
    emb, w_ih, w_hh, b_ih, b_hh = raw
    h = hidden0.reshape(1, hidden)
    outs = []
    for t in range(tokens.shape[0]):
        x = emb[tokens[t]][None, :]
        h = _gru_cell_ref(x, h, w_ih, w_hh, b_ih, b_hh)
        outs.append(h)
    outputs = jnp.stack(outs).reshape(len(outs), 1, 1, hidden)
    return outputs, h.reshape(1, 1, hidden)


if __name__ == "__main__":
    key = jax.random.PRNGKey(0)
    k_params, k_hidden, k_tok = jax.random.split(key, 3)
    raw = init_params(k_params)
    packed = pack_params(*raw)

    T = 8
    tokens = jax.random.randint(k_tok, (T,), 0, VOCAB, dtype=jnp.int32)
    hidden0 = jax.random.normal(k_hidden, (1, 1, HIDDEN), jnp.float32)

    # full-sequence kernel (one pallas_call, one grid step for all T tokens)
    outputs, hfinal = encoder_rnn_sequence(tokens, hidden0, packed)
    outputs = jax.block_until_ready(outputs)
    hfinal = jax.block_until_ready(hfinal)

    ref_outputs, ref_h = encoder_rnn_reference(tokens, hidden0, raw)
    assert outputs.shape == (T, 1, 1, HIDDEN) and hfinal.shape == (1, 1, HIDDEN)
    assert jnp.allclose(outputs, ref_outputs, atol=1e-4, rtol=1e-4)
    assert jnp.allclose(hfinal, ref_h, atol=1e-4, rtol=1e-4)

    # single-token call matching EncoderRNN.forward exactly
    out1, h1 = encoder_rnn_forward(tokens[:1], hidden0, packed)
    out1 = jax.block_until_ready(out1)
    h1 = jax.block_until_ready(h1)
    ref_out1, ref_h1 = encoder_rnn_reference(tokens[:1], hidden0, raw)
    assert out1.shape == (1, 1, HIDDEN) and h1.shape == (1, 1, HIDDEN)
    assert jnp.allclose(out1, ref_out1[0], atol=1e-4, rtol=1e-4)
    assert jnp.allclose(h1, ref_h1, atol=1e-4, rtol=1e-4)

    print("KERNEL_OK")
</pallas_src>

<mosaic_0001>
module attributes {stable_mosaic.version = 11 : i64} {
  func.func @gru_seq_kernel(%arg0: i32, %arg1: memref<8xi32, #tpu.memory_space<smem>>, %arg2: memref<16x64xf32, #tpu.memory_space<vmem>>, %arg3: memref<1x128xf32, #tpu.memory_space<vmem>>, %arg4: memref<64x384xf32, #tpu.memory_space<vmem>>, %arg5: memref<64x384xf32, #tpu.memory_space<vmem>>, %arg6: memref<1x384xf32, #tpu.memory_space<vmem>>, %arg7: memref<1x384xf32, #tpu.memory_space<vmem>>, %arg8: memref<8x128xf32, #tpu.memory_space<vmem>>, %arg9: memref<8x64xf32, #tpu.memory_space<vmem>>, %arg10: memref<8x384xf32, #tpu.memory_space<vmem>>) attributes {dimension_semantics = [#tpu.dimension_semantics<arbitrary>], iteration_bounds = array<i64: 1>, scalar_prefetch = 1 : i64, scratch_operands = 2 : i64, tpu.core_type = #tpu.core_type<tc>, window_params = [{pipeline_mode = #tpu.pipeline_mode<synchronous>, transform_indices = @transform_0, window_bounds = array<i64: 16, 64>}, {pipeline_mode = #tpu.pipeline_mode<synchronous>, transform_indices = @transform_1, window_bounds = array<i64: 1, 128>}, {pipeline_mode = #tpu.pipeline_mode<synchronous>, transform_indices = @transform_2, window_bounds = array<i64: 64, 384>}, {pipeline_mode = #tpu.pipeline_mode<synchronous>, transform_indices = @transform_3, window_bounds = array<i64: 64, 384>}, {pipeline_mode = #tpu.pipeline_mode<synchronous>, transform_indices = @transform_4, window_bounds = array<i64: 1, 384>}, {pipeline_mode = #tpu.pipeline_mode<synchronous>, transform_indices = @transform_5, window_bounds = array<i64: 1, 384>}, {pipeline_mode = #tpu.pipeline_mode<synchronous>, transform_indices = @transform_6, window_bounds = array<i64: 8, 128>}]} {
    %c0 = arith.constant 0 : index
    %0 = memref.load %arg1[%c0] : memref<8xi32, #tpu.memory_space<smem>>
    %1 = arith.index_cast %0 : i32 to index
    %c0_0 = arith.constant 0 : index
    %2 = vector.load %arg2[%1, %c0_0] : memref<16x64xf32, #tpu.memory_space<vmem>>, vector<1x64xf32>
    %c0_1 = arith.constant 0 : index
    %c0_2 = arith.constant 0 : index
    %3 = vector.load %arg9[%c0_1, %c0_2] : memref<8x64xf32, #tpu.memory_space<vmem>>, vector<1x64xf32>
    tpu.vector_store %arg9[%c0_1, %c0_2], %2 {strides = array<i32>} : memref<8x64xf32, #tpu.memory_space<vmem>>, vector<1x64xf32>,
    %c1 = arith.constant 1 : index
    %4 = memref.load %arg1[%c1] : memref<8xi32, #tpu.memory_space<smem>>
    %5 = arith.index_cast %4 : i32 to index
    %c0_3 = arith.constant 0 : index
    %6 = vector.load %arg2[%5, %c0_3] : memref<16x64xf32, #tpu.memory_space<vmem>>, vector<1x64xf32>
    %c1_4 = arith.constant 1 : index
    %c0_5 = arith.constant 0 : index
    %7 = vector.load %arg9[%c1_4, %c0_5] : memref<8x64xf32, #tpu.memory_space<vmem>>, vector<1x64xf32>
    tpu.vector_store %arg9[%c1_4, %c0_5], %6 {strides = array<i32>} : memref<8x64xf32, #tpu.memory_space<vmem>>, vector<1x64xf32>,
    %c2 = arith.constant 2 : index
    %8 = memref.load %arg1[%c2] : memref<8xi32, #tpu.memory_space<smem>>
    %9 = arith.index_cast %8 : i32 to index
    %c0_6 = arith.constant 0 : index
    %10 = vector.load %arg2[%9, %c0_6] : memref<16x64xf32, #tpu.memory_space<vmem>>, vector<1x64xf32>
    %c2_7 = arith.constant 2 : index
    %c0_8 = arith.constant 0 : index
    %11 = vector.load %arg9[%c2_7, %c0_8] : memref<8x64xf32, #tpu.memory_space<vmem>>, vector<1x64xf32>
    tpu.vector_store %arg9[%c2_7, %c0_8], %10 {strides = array<i32>} : memref<8x64xf32, #tpu.memory_space<vmem>>, vector<1x64xf32>,
    %c3 = arith.constant 3 : index
    %12 = memref.load %arg1[%c3] : memref<8xi32, #tpu.memory_space<smem>>
    %13 = arith.index_cast %12 : i32 to index
    %c0_9 = arith.constant 0 : index
    %14 = vector.load %arg2[%13, %c0_9] : memref<16x64xf32, #tpu.memory_space<vmem>>, vector<1x64xf32>
    %c3_10 = arith.constant 3 : index
    %c0_11 = arith.constant 0 : index
    %15 = vector.load %arg9[%c3_10, %c0_11] : memref<8x64xf32, #tpu.memory_space<vmem>>, vector<1x64xf32>
    tpu.vector_store %arg9[%c3_10, %c0_11], %14 {strides = array<i32>} : memref<8x64xf32, #tpu.memory_space<vmem>>, vector<1x64xf32>,
    %c4 = arith.constant 4 : index
    %16 = memref.load %arg1[%c4] : memref<8xi32, #tpu.memory_space<smem>>
    %17 = arith.index_cast %16 : i32 to index
    %c0_12 = arith.constant 0 : index
    %18 = vector.load %arg2[%17, %c0_12] : memref<16x64xf32, #tpu.memory_space<vmem>>, vector<1x64xf32>
    %c4_13 = arith.constant 4 : index
    %c0_14 = arith.constant 0 : index
    %19 = vector.load %arg9[%c4_13, %c0_14] : memref<8x64xf32, #tpu.memory_space<vmem>>, vector<1x64xf32>
    tpu.vector_store %arg9[%c4_13, %c0_14], %18 {strides = array<i32>} : memref<8x64xf32, #tpu.memory_space<vmem>>, vector<1x64xf32>,
    %c5 = arith.constant 5 : index
    %20 = memref.load %arg1[%c5] : memref<8xi32, #tpu.memory_space<smem>>
    %21 = arith.index_cast %20 : i32 to index
    %c0_15 = arith.constant 0 : index
    %22 = vector.load %arg2[%21, %c0_15] : memref<16x64xf32, #tpu.memory_space<vmem>>, vector<1x64xf32>
    %c5_16 = arith.constant 5 : index
    %c0_17 = arith.constant 0 : index
    %23 = vector.load %arg9[%c5_16, %c0_17] : memref<8x64xf32, #tpu.memory_space<vmem>>, vector<1x64xf32>
    tpu.vector_store %arg9[%c5_16, %c0_17], %22 {strides = array<i32>} : memref<8x64xf32, #tpu.memory_space<vmem>>, vector<1x64xf32>,
    %c6 = arith.constant 6 : index
    %24 = memref.load %arg1[%c6] : memref<8xi32, #tpu.memory_space<smem>>
    %25 = arith.index_cast %24 : i32 to index
    %c0_18 = arith.constant 0 : index
    %26 = vector.load %arg2[%25, %c0_18] : memref<16x64xf32, #tpu.memory_space<vmem>>, vector<1x64xf32>
    %c6_19 = arith.constant 6 : index
    %c0_20 = arith.constant 0 : index
    %27 = vector.load %arg9[%c6_19, %c0_20] : memref<8x64xf32, #tpu.memory_space<vmem>>, vector<1x64xf32>
    tpu.vector_store %arg9[%c6_19, %c0_20], %26 {strides = array<i32>} : memref<8x64xf32, #tpu.memory_space<vmem>>, vector<1x64xf32>,
    %c7 = arith.constant 7 : index
    %28 = memref.load %arg1[%c7] : memref<8xi32, #tpu.memory_space<smem>>
    %29 = arith.index_cast %28 : i32 to index
    %c0_21 = arith.constant 0 : index
    %30 = vector.load %arg2[%29, %c0_21] : memref<16x64xf32, #tpu.memory_space<vmem>>, vector<1x64xf32>
    %c7_22 = arith.constant 7 : index
    %c0_23 = arith.constant 0 : index
    %31 = vector.load %arg9[%c7_22, %c0_23] : memref<8x64xf32, #tpu.memory_space<vmem>>, vector<1x64xf32>
    tpu.vector_store %arg9[%c7_22, %c0_23], %30 {strides = array<i32>} : memref<8x64xf32, #tpu.memory_space<vmem>>, vector<1x64xf32>,
    %c0_24 = arith.constant 0 : index
    %c0_25 = arith.constant 0 : index
    %32 = vector.load %arg9[%c0_24, %c0_25] : memref<8x64xf32, #tpu.memory_space<vmem>>, vector<8x64xf32>
    %c0_26 = arith.constant 0 : index
    %c0_27 = arith.constant 0 : index
    %33 = vector.load %arg4[%c0_26, %c0_27] : memref<64x384xf32, #tpu.memory_space<vmem>>, vector<64x384xf32>
    %cst = arith.constant dense<0.000000e+00> : vector<8x384xf32>
    %34 = tpu.matmul %32, %33, %cst {dimension_numbers = #tpu.dot_dimension_numbers<[1], [0], [0], [1], [0, 0, 1, 1], [], []>} : vector<8x64xf32>, vector<64x384xf32>, vector<8x384xf32> -> vector<8x384xf32>
    %c0_28 = arith.constant 0 : index
    %c0_29 = arith.constant 0 : index
    %35 = vector.load %arg6[%c0_28, %c0_29] : memref<1x384xf32, #tpu.memory_space<vmem>>, vector<1x384xf32>
    %36 = vector.broadcast %35 : vector<1x384xf32> to vector<8x384xf32>
    %37 = arith.addf %34, %36 : vector<8x384xf32>
    %c0_30 = arith.constant 0 : index
    %c0_31 = arith.constant 0 : index
    %38 = vector.load %arg10[%c0_30, %c0_31] : memref<8x384xf32, #tpu.memory_space<vmem>>, vector<8x384xf32>
    tpu.vector_store %arg10[%c0_30, %c0_31], %37 {strides = array<i32>} : memref<8x384xf32, #tpu.memory_space<vmem>>, vector<8x384xf32>,
    %c0_32 = arith.constant 0 : index
    %c0_33 = arith.constant 0 : index
    %39 = vector.load %arg5[%c0_32, %c0_33] : memref<64x384xf32, #tpu.memory_space<vmem>>, vector<64x384xf32>
    %c0_34 = arith.constant 0 : index
    %c0_35 = arith.constant 0 : index
    %40 = vector.load %arg7[%c0_34, %c0_35] : memref<1x384xf32, #tpu.memory_space<vmem>>, vector<1x384xf32>
    %c0_36 = arith.constant 0 : index
    %c0_37 = arith.constant 0 : index
    %41 = vector.load %arg3[%c0_36, %c0_37] : memref<1x128xf32, #tpu.memory_space<vmem>>, vector<1x128xf32>
    %c0_38 = arith.constant 0 : index
    %c0_39 = arith.constant 0 : index
    %42 = vector.load %arg10[%c0_38, %c0_39] : memref<8x384xf32, #tpu.memory_space<vmem>>, vector<1x384xf32>
    %43 = vector.extract_strided_slice %41 {offsets = [0, 0], sizes = [1, 64], strides = [1, 1]} : vector<1x128xf32> to vector<1x64xf32>
    %cst_40 = arith.constant dense<0.000000e+00> : vector<1x384xf32>
    %44 = tpu.matmul %43, %39, %cst_40 {dimension_numbers = #tpu.dot_dimension_numbers<[1], [0], [0], [1], [0, 0, 1, 1], [], []>} : vector<1x64xf32>, vector<64x384xf32>, vector<1x384xf32> -> vector<1x384xf32>
    %45 = arith.addf %44, %40 : vector<1x384xf32>
    %46 = vector.extract_strided_slice %42 {offsets = [0, 0], sizes = [1, 256], strides = [1, 1]} : vector<1x384xf32> to vector<1x256xf32>
    %47 = vector.extract_strided_slice %45 {offsets = [0, 0], sizes = [1, 256], strides = [1, 1]} : vector<1x384xf32> to vector<1x256xf32>
    %48 = arith.addf %46, %47 : vector<1x256xf32>
    %49 = arith.negf %48 : vector<1x256xf32>
    %50 = math.exp %49 : vector<1x256xf32>
    %cst_41 = arith.constant 1.000000e+00 : f32
    %51 = vector.broadcast %cst_41 : f32 to vector<1x256xf32>
    %52 = arith.addf %51, %50 : vector<1x256xf32>
    %53 = arith.divf %51, %52 : vector<1x256xf32>
    %54 = vector.extract_strided_slice %53 {offsets = [0, 0], sizes = [1, 128], strides = [1, 1]} : vector<1x256xf32> to vector<1x128xf32>
    %55 = vector.extract_strided_slice %53 {offsets = [0, 128], sizes = [1, 128], strides = [1, 1]} : vector<1x256xf32> to vector<1x128xf32>
    %56 = vector.extract_strided_slice %42 {offsets = [0, 256], sizes = [1, 128], strides = [1, 1]} : vector<1x384xf32> to vector<1x128xf32>
    %57 = vector.extract_strided_slice %45 {offsets = [0, 256], sizes = [1, 128], strides = [1, 1]} : vector<1x384xf32> to vector<1x128xf32>
    %58 = arith.mulf %54, %57 : vector<1x128xf32>
    %59 = arith.addf %56, %58 : vector<1x128xf32>
    %60 = math.tanh %59 : vector<1x128xf32>
    %cst_42 = arith.constant 1.000000e+00 : f32
    %61 = vector.broadcast %cst_42 : f32 to vector<1x128xf32>
    %62 = arith.subf %61, %55 : vector<1x128xf32>
    %63 = arith.mulf %62, %60 : vector<1x128xf32>
    %64 = arith.mulf %55, %41 : vector<1x128xf32>
    %65 = arith.addf %63, %64 : vector<1x128xf32>
    %c0_43 = arith.constant 0 : index
    %c0_44 = arith.constant 0 : index
    %66 = vector.load %arg8[%c0_43, %c0_44] : memref<8x128xf32, #tpu.memory_space<vmem>>, vector<1x128xf32>
    tpu.vector_store %arg8[%c0_43, %c0_44], %65 {strides = array<i32>} : memref<8x128xf32, #tpu.memory_space<vmem>>, vector<1x128xf32>,
    %c1_45 = arith.constant 1 : index
    %c0_46 = arith.constant 0 : index
    %67 = vector.load %arg10[%c1_45, %c0_46] : memref<8x384xf32, #tpu.memory_space<vmem>>, vector<1x384xf32>
    %68 = vector.extract_strided_slice %65 {offsets = [0, 0], sizes = [1, 64], strides = [1, 1]} : vector<1x128xf32> to vector<1x64xf32>
    %cst_47 = arith.constant dense<0.000000e+00> : vector<1x384xf32>
    %69 = tpu.matmul %68, %39, %cst_47 {dimension_numbers = #tpu.dot_dimension_numbers<[1], [0], [0], [1], [0, 0, 1, 1], [], []>} : vector<1x64xf32>, vector<64x384xf32>, vector<1x384xf32> -> vector<1x384xf32>
    %70 = arith.addf %69, %40 : vector<1x384xf32>
    %71 = vector.extract_strided_slice %67 {offsets = [0, 0], sizes = [1, 256], strides = [1, 1]} : vector<1x384xf32> to vector<1x256xf32>
    %72 = vector.extract_strided_slice %70 {offsets = [0, 0], sizes = [1, 256], strides = [1, 1]} : vector<1x384xf32> to vector<1x256xf32>
    %73 = arith.addf %71, %72 : vector<1x256xf32>
    %74 = arith.negf %73 : vector<1x256xf32>
    %75 = math.exp %74 : vector<1x256xf32>
    %cst_48 = arith.constant 1.000000e+00 : f32
    %76 = vector.broadcast %cst_48 : f32 to vector<1x256xf32>
    %77 = arith.addf %76, %75 : vector<1x256xf32>
    %78 = arith.divf %76, %77 : vector<1x256xf32>
    %79 = vector.extract_strided_slice %78 {offsets = [0, 0], sizes = [1, 128], strides = [1, 1]} : vector<1x256xf32> to vector<1x128xf32>
    %80 = vector.extract_strided_slice %78 {offsets = [0, 128], sizes = [1, 128], strides = [1, 1]} : vector<1x256xf32> to vector<1x128xf32>
    %81 = vector.extract_strided_slice %67 {offsets = [0, 256], sizes = [1, 128], strides = [1, 1]} : vector<1x384xf32> to vector<1x128xf32>
    %82 = vector.extract_strided_slice %70 {offsets = [0, 256], sizes = [1, 128], strides = [1, 1]} : vector<1x384xf32> to vector<1x128xf32>
    %83 = arith.mulf %79, %82 : vector<1x128xf32>
    %84 = arith.addf %81, %83 : vector<1x128xf32>
    %85 = math.tanh %84 : vector<1x128xf32>
    %cst_49 = arith.constant 1.000000e+00 : f32
    %86 = vector.broadcast %cst_49 : f32 to vector<1x128xf32>
    %87 = arith.subf %86, %80 : vector<1x128xf32>
    %88 = arith.mulf %87, %85 : vector<1x128xf32>
    %89 = arith.mulf %80, %65 : vector<1x128xf32>
    %90 = arith.addf %88, %89 : vector<1x128xf32>
    %c1_50 = arith.constant 1 : index
    %c0_51 = arith.constant 0 : index
    %91 = vector.load %arg8[%c1_50, %c0_51] : memref<8x128xf32, #tpu.memory_space<vmem>>, vector<1x128xf32>
    tpu.vector_store %arg8[%c1_50, %c0_51], %90 {strides = array<i32>} : memref<8x128xf32, #tpu.memory_space<vmem>>, vector<1x128xf32>,
    %c2_52 = arith.constant 2 : index
    %c0_53 = arith.constant 0 : index
    %92 = vector.load %arg10[%c2_52, %c0_53] : memref<8x384xf32, #tpu.memory_space<vmem>>, vector<1x384xf32>
    %93 = vector.extract_strided_slice %90 {offsets = [0, 0], sizes = [1, 64], strides = [1, 1]} : vector<1x128xf32> to vector<1x64xf32>
    %cst_54 = arith.constant dense<0.000000e+00> : vector<1x384xf32>
    %94 = tpu.matmul %93, %39, %cst_54 {dimension_numbers = #tpu.dot_dimension_numbers<[1], [0], [0], [1], [0, 0, 1, 1], [], []>} : vector<1x64xf32>, vector<64x384xf32>, vector<1x384xf32> -> vector<1x384xf32>
    %95 = arith.addf %94, %40 : vector<1x384xf32>
    %96 = vector.extract_strided_slice %92 {offsets = [0, 0], sizes = [1, 256], strides = [1, 1]} : vector<1x384xf32> to vector<1x256xf32>
    %97 = vector.extract_strided_slice %95 {offsets = [0, 0], sizes = [1, 256], strides = [1, 1]} : vector<1x384xf32> to vector<1x256xf32>
    %98 = arith.addf %96, %97 : vector<1x256xf32>
    %99 = arith.negf %98 : vector<1x256xf32>
    %100 = math.exp %99 : vector<1x256xf32>
    %cst_55 = arith.constant 1.000000e+00 : f32
    %101 = vector.broadcast %cst_55 : f32 to vector<1x256xf32>
    %102 = arith.addf %101, %100 : vector<1x256xf32>
    %103 = arith.divf %101, %102 : vector<1x256xf32>
    %104 = vector.extract_strided_slice %103 {offsets = [0, 0], sizes = [1, 128], strides = [1, 1]} : vector<1x256xf32> to vector<1x128xf32>
    %105 = vector.extract_strided_slice %103 {offsets = [0, 128], sizes = [1, 128], strides = [1, 1]} : vector<1x256xf32> to vector<1x128xf32>
    %106 = vector.extract_strided_slice %92 {offsets = [0, 256], sizes = [1, 128], strides = [1, 1]} : vector<1x384xf32> to vector<1x128xf32>
    %107 = vector.extract_strided_slice %95 {offsets = [0, 256], sizes = [1, 128], strides = [1, 1]} : vector<1x384xf32> to vector<1x128xf32>
    %108 = arith.mulf %104, %107 : vector<1x128xf32>
    %109 = arith.addf %106, %108 : vector<1x128xf32>
    %110 = math.tanh %109 : vector<1x128xf32>
    %cst_56 = arith.constant 1.000000e+00 : f32
    %111 = vector.broadcast %cst_56 : f32 to vector<1x128xf32>
    %112 = arith.subf %111, %105 : vector<1x128xf32>
    %113 = arith.mulf %112, %110 : vector<1x128xf32>
    %114 = arith.mulf %105, %90 : vector<1x128xf32>
    %115 = arith.addf %113, %114 : vector<1x128xf32>
    %c2_57 = arith.constant 2 : index
    %c0_58 = arith.constant 0 : index
    %116 = vector.load %arg8[%c2_57, %c0_58] : memref<8x128xf32, #tpu.memory_space<vmem>>, vector<1x128xf32>
    tpu.vector_store %arg8[%c2_57, %c0_58], %115 {strides = array<i32>} : memref<8x128xf32, #tpu.memory_space<vmem>>, vector<1x128xf32>,
    %c3_59 = arith.constant 3 : index
    %c0_60 = arith.constant 0 : index
    %117 = vector.load %arg10[%c3_59, %c0_60] : memref<8x384xf32, #tpu.memory_space<vmem>>, vector<1x384xf32>
    %118 = vector.extract_strided_slice %115 {offsets = [0, 0], sizes = [1, 64], strides = [1, 1]} : vector<1x128xf32> to vector<1x64xf32>
    %cst_61 = arith.constant dense<0.000000e+00> : vector<1x384xf32>
    %119 = tpu.matmul %118, %39, %cst_61 {dimension_numbers = #tpu.dot_dimension_numbers<[1], [0], [0], [1], [0, 0, 1, 1], [], []>} : vector<1x64xf32>, vector<64x384xf32>, vector<1x384xf32> -> vector<1x384xf32>
    %120 = arith.addf %119, %40 : vector<1x384xf32>
    %121 = vector.extract_strided_slice %117 {offsets = [0, 0], sizes = [1, 256], strides = [1, 1]} : vector<1x384xf32> to vector<1x256xf32>
    %122 = vector.extract_strided_slice %120 {offsets = [0, 0], sizes = [1, 256], strides = [1, 1]} : vector<1x384xf32> to vector<1x256xf32>
    %123 = arith.addf %121, %122 : vector<1x256xf32>
    %124 = arith.negf %123 : vector<1x256xf32>
    %125 = math.exp %124 : vector<1x256xf32>
    %cst_62 = arith.constant 1.000000e+00 : f32
    %126 = vector.broadcast %cst_62 : f32 to vector<1x256xf32>
    %127 = arith.addf %126, %125 : vector<1x256xf32>
    %128 = arith.divf %126, %127 : vector<1x256xf32>
    %129 = vector.extract_strided_slice %128 {offsets = [0, 0], sizes = [1, 128], strides = [1, 1]} : vector<1x256xf32> to vector<1x128xf32>
    %130 = vector.extract_strided_slice %128 {offsets = [0, 128], sizes = [1, 128], strides = [1, 1]} : vector<1x256xf32> to vector<1x128xf32>
    %131 = vector.extract_strided_slice %117 {offsets = [0, 256], sizes = [1, 128], strides = [1, 1]} : vector<1x384xf32> to vector<1x128xf32>
    %132 = vector.extract_strided_slice %120 {offsets = [0, 256], sizes = [1, 128], strides = [1, 1]} : vector<1x384xf32> to vector<1x128xf32>
    %133 = arith.mulf %129, %132 : vector<1x128xf32>
    %134 = arith.addf %131, %133 : vector<1x128xf32>
    %135 = math.tanh %134 : vector<1x128xf32>
    %cst_63 = arith.constant 1.000000e+00 : f32
    %136 = vector.broadcast %cst_63 : f32 to vector<1x128xf32>
    %137 = arith.subf %136, %130 : vector<1x128xf32>
    %138 = arith.mulf %137, %135 : vector<1x128xf32>
    %139 = arith.mulf %130, %115 : vector<1x128xf32>
    %140 = arith.addf %138, %139 : vector<1x128xf32>
    %c3_64 = arith.constant 3 : index
    %c0_65 = arith.constant 0 : index
    %141 = vector.load %arg8[%c3_64, %c0_65] : memref<8x128xf32, #tpu.memory_space<vmem>>, vector<1x128xf32>
    tpu.vector_store %arg8[%c3_64, %c0_65], %140 {strides = array<i32>} : memref<8x128xf32, #tpu.memory_space<vmem>>, vector<1x128xf32>,
    %c4_66 = arith.constant 4 : index
    %c0_67 = arith.constant 0 : index
    %142 = vector.load %arg10[%c4_66, %c0_67] : memref<8x384xf32, #tpu.memory_space<vmem>>, vector<1x384xf32>
    %143 = vector.extract_strided_slice %140 {offsets = [0, 0], sizes = [1, 64], strides = [1, 1]} : vector<1x128xf32> to vector<1x64xf32>
    %cst_68 = arith.constant dense<0.000000e+00> : vector<1x384xf32>
    %144 = tpu.matmul %143, %39, %cst_68 {dimension_numbers = #tpu.dot_dimension_numbers<[1], [0], [0], [1], [0, 0, 1, 1], [], []>} : vector<1x64xf32>, vector<64x384xf32>, vector<1x384xf32> -> vector<1x384xf32>
    %145 = arith.addf %144, %40 : vector<1x384xf32>
    %146 = vector.extract_strided_slice %142 {offsets = [0, 0], sizes = [1, 256], strides = [1, 1]} : vector<1x384xf32> to vector<1x256xf32>
    %147 = vector.extract_strided_slice %145 {offsets = [0, 0], sizes = [1, 256], strides = [1, 1]} : vector<1x384xf32> to vector<1x256xf32>
    %148 = arith.addf %146, %147 : vector<1x256xf32>
    %149 = arith.negf %148 : vector<1x256xf32>
    %150 = math.exp %149 : vector<1x256xf32>
    %cst_69 = arith.constant 1.000000e+00 : f32
    %151 = vector.broadcast %cst_69 : f32 to vector<1x256xf32>
    %152 = arith.addf %151, %150 : vector<1x256xf32>
    %153 = arith.divf %151, %152 : vector<1x256xf32>
    %154 = vector.extract_strided_slice %153 {offsets = [0, 0], sizes = [1, 128], strides = [1, 1]} : vector<1x256xf32> to vector<1x128xf32>
    %155 = vector.extract_strided_slice %153 {offsets = [0, 128], sizes = [1, 128], strides = [1, 1]} : vector<1x256xf32> to vector<1x128xf32>
    %156 = vector.extract_strided_slice %142 {offsets = [0, 256], sizes = [1, 128], strides = [1, 1]} : vector<1x384xf32> to vector<1x128xf32>
    %157 = vector.extract_strided_slice %145 {offsets = [0, 256], sizes = [1, 128], strides = [1, 1]} : vector<1x384xf32> to vector<1x128xf32>
    %158 = arith.mulf %154, %157 : vector<1x128xf32>
    %159 = arith.addf %156, %158 : vector<1x128xf32>
    %160 = math.tanh %159 : vector<1x128xf32>
    %cst_70 = arith.constant 1.000000e+00 : f32
    %161 = vector.broadcast %cst_70 : f32 to vector<1x128xf32>
    %162 = arith.subf %161, %155 : vector<1x128xf32>
    %163 = arith.mulf %162, %160 : vector<1x128xf32>
    %164 = arith.mulf %155, %140 : vector<1x128xf32>
    %165 = arith.addf %163, %164 : vector<1x128xf32>
    %c4_71 = arith.constant 4 : index
    %c0_72 = arith.constant 0 : index
    %166 = vector.load %arg8[%c4_71, %c0_72] : memref<8x128xf32, #tpu.memory_space<vmem>>, vector<1x128xf32>
    tpu.vector_store %arg8[%c4_71, %c0_72], %165 {strides = array<i32>} : memref<8x128xf32, #tpu.memory_space<vmem>>, vector<1x128xf32>,
    %c5_73 = arith.constant 5 : index
    %c0_74 = arith.constant 0 : index
    %167 = vector.load %arg10[%c5_73, %c0_74] : memref<8x384xf32, #tpu.memory_space<vmem>>, vector<1x384xf32>
    %168 = vector.extract_strided_slice %165 {offsets = [0, 0], sizes = [1, 64], strides = [1, 1]} : vector<1x128xf32> to vector<1x64xf32>
    %cst_75 = arith.constant dense<0.000000e+00> : vector<1x384xf32>
    %169 = tpu.matmul %168, %39, %cst_75 {dimension_numbers = #tpu.dot_dimension_numbers<[1], [0], [0], [1], [0, 0, 1, 1], [], []>} : vector<1x64xf32>, vector<64x384xf32>, vector<1x384xf32> -> vector<1x384xf32>
    %170 = arith.addf %169, %40 : vector<1x384xf32>
    %171 = vector.extract_strided_slice %167 {offsets = [0, 0], sizes = [1, 256], strides = [1, 1]} : vector<1x384xf32> to vector<1x256xf32>
    %172 = vector.extract_strided_slice %170 {offsets = [0, 0], sizes = [1, 256], strides = [1, 1]} : vector<1x384xf32> to vector<1x256xf32>
    %173 = arith.addf %171, %172 : vector<1x256xf32>
    %174 = arith.negf %173 : vector<1x256xf32>
    %175 = math.exp %174 : vector<1x256xf32>
    %cst_76 = arith.constant 1.000000e+00 : f32
    %176 = vector.broadcast %cst_76 : f32 to vector<1x256xf32>
    %177 = arith.addf %176, %175 : vector<1x256xf32>
    %178 = arith.divf %176, %177 : vector<1x256xf32>
    %179 = vector.extract_strided_slice %178 {offsets = [0, 0], sizes = [1, 128], strides = [1, 1]} : vector<1x256xf32> to vector<1x128xf32>
    %180 = vector.extract_strided_slice %178 {offsets = [0, 128], sizes = [1, 128], strides = [1, 1]} : vector<1x256xf32> to vector<1x128xf32>
    %181 = vector.extract_strided_slice %167 {offsets = [0, 256], sizes = [1, 128], strides = [1, 1]} : vector<1x384xf32> to vector<1x128xf32>
    %182 = vector.extract_strided_slice %170 {offsets = [0, 256], sizes = [1, 128], strides = [1, 1]} : vector<1x384xf32> to vector<1x128xf32>
    %183 = arith.mulf %179, %182 : vector<1x128xf32>
    %184 = arith.addf %181, %183 : vector<1x128xf32>
    %185 = math.tanh %184 : vector<1x128xf32>
    %cst_77 = arith.constant 1.000000e+00 : f32
    %186 = vector.broadcast %cst_77 : f32 to vector<1x128xf32>
    %187 = arith.subf %186, %180 : vector<1x128xf32>
    %188 = arith.mulf %187, %185 : vector<1x128xf32>
    %189 = arith.mulf %180, %165 : vector<1x128xf32>
    %190 = arith.addf %188, %189 : vector<1x128xf32>
    %c5_78 = arith.constant 5 : index
    %c0_79 = arith.constant 0 : index
    %191 = vector.load %arg8[%c5_78, %c0_79] : memref<8x128xf32, #tpu.memory_space<vmem>>, vector<1x128xf32>
    tpu.vector_store %arg8[%c5_78, %c0_79], %190 {strides = array<i32>} : memref<8x128xf32, #tpu.memory_space<vmem>>, vector<1x128xf32>,
    %c6_80 = arith.constant 6 : index
    %c0_81 = arith.constant 0 : index
    %192 = vector.load %arg10[%c6_80, %c0_81] : memref<8x384xf32, #tpu.memory_space<vmem>>, vector<1x384xf32>
    %193 = vector.extract_strided_slice %190 {offsets = [0, 0], sizes = [1, 64], strides = [1, 1]} : vector<1x128xf32> to vector<1x64xf32>
    %cst_82 = arith.constant dense<0.000000e+00> : vector<1x384xf32>
    %194 = tpu.matmul %193, %39, %cst_82 {dimension_numbers = #tpu.dot_dimension_numbers<[1], [0], [0], [1], [0, 0, 1, 1], [], []>} : vector<1x64xf32>, vector<64x384xf32>, vector<1x384xf32> -> vector<1x384xf32>
    %195 = arith.addf %194, %40 : vector<1x384xf32>
    %196 = vector.extract_strided_slice %192 {offsets = [0, 0], sizes = [1, 256], strides = [1, 1]} : vector<1x384xf32> to vector<1x256xf32>
    %197 = vector.extract_strided_slice %195 {offsets = [0, 0], sizes = [1, 256], strides = [1, 1]} : vector<1x384xf32> to vector<1x256xf32>
    %198 = arith.addf %196, %197 : vector<1x256xf32>
    %199 = arith.negf %198 : vector<1x256xf32>
    %200 = math.exp %199 : vector<1x256xf32>
    %cst_83 = arith.constant 1.000000e+00 : f32
    %201 = vector.broadcast %cst_83 : f32 to vector<1x256xf32>
    %202 = arith.addf %201, %200 : vector<1x256xf32>
    %203 = arith.divf %201, %202 : vector<1x256xf32>
    %204 = vector.extract_strided_slice %203 {offsets = [0, 0], sizes = [1, 128], strides = [1, 1]} : vector<1x256xf32> to vector<1x128xf32>
    %205 = vector.extract_strided_slice %203 {offsets = [0, 128], sizes = [1, 128], strides = [1, 1]} : vector<1x256xf32> to vector<1x128xf32>
    %206 = vector.extract_strided_slice %192 {offsets = [0, 256], sizes = [1, 128], strides = [1, 1]} : vector<1x384xf32> to vector<1x128xf32>
    %207 = vector.extract_strided_slice %195 {offsets = [0, 256], sizes = [1, 128], strides = [1, 1]} : vector<1x384xf32> to vector<1x128xf32>
    %208 = arith.mulf %204, %207 : vector<1x128xf32>
    %209 = arith.addf %206, %208 : vector<1x128xf32>
    %210 = math.tanh %209 : vector<1x128xf32>
    %cst_84 = arith.constant 1.000000e+00 : f32
    %211 = vector.broadcast %cst_84 : f32 to vector<1x128xf32>
    %212 = arith.subf %211, %205 : vector<1x128xf32>
    %213 = arith.mulf %212, %210 : vector<1x128xf32>
    %214 = arith.mulf %205, %190 : vector<1x128xf32>
    %215 = arith.addf %213, %214 : vector<1x128xf32>
    %c6_85 = arith.constant 6 : index
    %c0_86 = arith.constant 0 : index
    %216 = vector.load %arg8[%c6_85, %c0_86] : memref<8x128xf32, #tpu.memory_space<vmem>>, vector<1x128xf32>
    tpu.vector_store %arg8[%c6_85, %c0_86], %215 {strides = array<i32>} : memref<8x128xf32, #tpu.memory_space<vmem>>, vector<1x128xf32>,
    %c7_87 = arith.constant 7 : index
    %c0_88 = arith.constant 0 : index
    %217 = vector.load %arg10[%c7_87, %c0_88] : memref<8x384xf32, #tpu.memory_space<vmem>>, vector<1x384xf32>
    %218 = vector.extract_strided_slice %215 {offsets = [0, 0], sizes = [1, 64], strides = [1, 1]} : vector<1x128xf32> to vector<1x64xf32>
    %cst_89 = arith.constant dense<0.000000e+00> : vector<1x384xf32>
    %219 = tpu.matmul %218, %39, %cst_89 {dimension_numbers = #tpu.dot_dimension_numbers<[1], [0], [0], [1], [0, 0, 1, 1], [], []>} : vector<1x64xf32>, vector<64x384xf32>, vector<1x384xf32> -> vector<1x384xf32>
    %220 = arith.addf %219, %40 : vector<1x384xf32>
    %221 = vector.extract_strided_slice %217 {offsets = [0, 0], sizes = [1, 256], strides = [1, 1]} : vector<1x384xf32> to vector<1x256xf32>
    %222 = vector.extract_strided_slice %220 {offsets = [0, 0], sizes = [1, 256], strides = [1, 1]} : vector<1x384xf32> to vector<1x256xf32>
    %223 = arith.addf %221, %222 : vector<1x256xf32>
    %224 = arith.negf %223 : vector<1x256xf32>
    %225 = math.exp %224 : vector<1x256xf32>
    %cst_90 = arith.constant 1.000000e+00 : f32
    %226 = vector.broadcast %cst_90 : f32 to vector<1x256xf32>
    %227 = arith.addf %226, %225 : vector<1x256xf32>
    %228 = arith.divf %226, %227 : vector<1x256xf32>
    %229 = vector.extract_strided_slice %228 {offsets = [0, 0], sizes = [1, 128], strides = [1, 1]} : vector<1x256xf32> to vector<1x128xf32>
    %230 = vector.extract_strided_slice %228 {offsets = [0, 128], sizes = [1, 128], strides = [1, 1]} : vector<1x256xf32> to vector<1x128xf32>
    %231 = vector.extract_strided_slice %217 {offsets = [0, 256], sizes = [1, 128], strides = [1, 1]} : vector<1x384xf32> to vector<1x128xf32>
    %232 = vector.extract_strided_slice %220 {offsets = [0, 256], sizes = [1, 128], strides = [1, 1]} : vector<1x384xf32> to vector<1x128xf32>
    %233 = arith.mulf %229, %232 : vector<1x128xf32>
    %234 = arith.addf %231, %233 : vector<1x128xf32>
    %235 = math.tanh %234 : vector<1x128xf32>
    %cst_91 = arith.constant 1.000000e+00 : f32
    %236 = vector.broadcast %cst_91 : f32 to vector<1x128xf32>
    %237 = arith.subf %236, %230 : vector<1x128xf32>
    %238 = arith.mulf %237, %235 : vector<1x128xf32>
    %239 = arith.mulf %230, %215 : vector<1x128xf32>
    %240 = arith.addf %238, %239 : vector<1x128xf32>
    %c7_92 = arith.constant 7 : index
    %c0_93 = arith.constant 0 : index
    %241 = vector.load %arg8[%c7_92, %c0_93] : memref<8x128xf32, #tpu.memory_space<vmem>>, vector<1x128xf32>
    tpu.vector_store %arg8[%c7_92, %c0_93], %240 {strides = array<i32>} : memref<8x128xf32, #tpu.memory_space<vmem>>, vector<1x128xf32>,
    return
  }
  func.func @transform_0(%arg0: i32, %arg1: memref<8xi32, #tpu.memory_space<smem>>) -> (i32, i32) {
    %c0_i32 = arith.constant 0 : i32
    %c0_i32_0 = arith.constant 0 : i32
    %c0_i32_1 = arith.constant 0 : i32
    return %c0_i32, %c0_i32_0 : i32, i32
  }
  func.func @transform_1(%arg0: i32, %arg1: memref<8xi32, #tpu.memory_space<smem>>) -> (i32, i32) {
    %c0_i32 = arith.constant 0 : i32
    %c0_i32_0 = arith.constant 0 : i32
    %c0_i32_1 = arith.constant 0 : i32
    return %c0_i32, %c0_i32_0 : i32, i32
  }
  func.func @transform_2(%arg0: i32, %arg1: memref<8xi32, #tpu.memory_space<smem>>) -> (i32, i32) {
    %c0_i32 = arith.constant 0 : i32
    %c0_i32_0 = arith.constant 0 : i32
    %c0_i32_1 = arith.constant 0 : i32
    return %c0_i32, %c0_i32_0 : i32, i32
  }
  func.func @transform_3(%arg0: i32, %arg1: memref<8xi32, #tpu.memory_space<smem>>) -> (i32, i32) {
    %c0_i32 = arith.constant 0 : i32
    %c0_i32_0 = arith.constant 0 : i32
    %c0_i32_1 = arith.constant 0 : i32
    return %c0_i32, %c0_i32_0 : i32, i32
  }
  func.func @transform_4(%arg0: i32, %arg1: memref<8xi32, #tpu.memory_space<smem>>) -> (i32, i32) {
    %c0_i32 = arith.constant 0 : i32
    %c0_i32_0 = arith.constant 0 : i32
    %c0_i32_1 = arith.constant 0 : i32
    return %c0_i32, %c0_i32_0 : i32, i32
  }
  func.func @transform_5(%arg0: i32, %arg1: memref<8xi32, #tpu.memory_space<smem>>) -> (i32, i32) {
    %c0_i32 = arith.constant 0 : i32
    %c0_i32_0 = arith.constant 0 : i32
    %c0_i32_1 = arith.constant 0 : i32
    return %c0_i32, %c0_i32_0 : i32, i32
  }
  func.func @transform_6(%arg0: i32, %arg1: memref<8xi32, #tpu.memory_space<smem>>) -> (i32, i32) {
    %c0_i32 = arith.constant 0 : i32
    %c0_i32_0 = arith.constant 0 : i32
    %c0_i32_1 = arith.constant 0 : i32
    return %c0_i32, %c0_i32_0 : i32, i32
  }
}

</mosaic_0001>

<llo_original>
// kernel: tpu_custom_call.1
$region0: #{tpu_custom_call.1}
  #allocation0 [shape = 'u32[]', space=smem, size = 0x4, offset = 0x4, fixed_abs, tag = 'smem constant byte address 0x4 - core index']
  #allocation1 [shape = 'u32[144,128]{1,0:T(1,128)}', space=vmem, size = 0x12000, scoped, tag = 'internal scratch']
  #allocation2 [shape = 'f32[8,64]{1,0:T(8,128)}', space=vmem, size = 0x1000, scoped, tag = 'scratch operand']
  #allocation3 [shape = 'f32[8,384]{1,0:T(8,128)}', space=vmem, size = 0x3000, scoped, tag = 'scratch operand']
  #allocation4 [shape = 's32[1]{0}', space=sflag, size = 0x4, scoped, tag = 'scoped memory for tpu_custom_call.1']
  #allocation5 [shape = 'u8[512]{0}', space=smem, size = 0x200, scoped, tag = 'prefetched SMEM operand 0']
  %s0 = inlined_call_operand.hbm [shape: s32[8], index: 0, kind: input, shape index: {}]
  %s1 = inlined_call_operand.hbm [shape: f32[16,64], index: 1, kind: input, shape index: {}]
  %s2 = inlined_call_operand.vmem [shape: f32[1,128], index: 2, kind: input, shape index: {}]
  %s3 = inlined_call_operand.hbm [shape: f32[64,384], index: 3, kind: input, shape index: {}]
  %s4 = inlined_call_operand.hbm [shape: f32[64,384], index: 4, kind: input, shape index: {}]
  %s5 = inlined_call_operand.vmem [shape: f32[1,384], index: 5, kind: input, shape index: {}]
  %s6 = inlined_call_operand.vmem [shape: f32[1,384], index: 6, kind: input, shape index: {}]
  %s7 = inlined_call_operand.hbm [shape: f32[8,128], index: 7, kind: output, shape index: {}]
  %s8 = sld [smem:[#allocation0]]
  $region46: #{tpu_custom_call.1} parent=0
    _
  %s10 = ssub.s32 1, %s8
  %s11 = scalar_select 0, %s10, %s8
  %13 = dma.hbm_to_smem %s0, 16, [#allocation5], [#allocation4]
  %14 = dma.done [#allocation4], 16
  %15 = sfence
  $region1: #{tpu_custom_call.1} parent=0
    #allocation6 [shape = 'u8[8192]{0}', space=vmem, size = 0x2000, scoped, tag = 'input window, operand 1, single buffered']
    #allocation7 [shape = 's32[1]{0}', space=sflag, size = 0x4, scoped, tag = 'scoped memory for tpu_custom_call.1']
    #allocation8 [shape = 's32[1]{0}', space=sflag, size = 0x4, scoped, tag = 'scoped memory for tpu_custom_call.1']
    #allocation9 [shape = 'u8[98304]{0}', space=vmem, size = 0x18000, scoped, tag = 'input window, operand 3, single buffered']
    #allocation10 [shape = 's32[1]{0}', space=sflag, size = 0x4, scoped, tag = 'scoped memory for tpu_custom_call.1']
    #allocation11 [shape = 'u8[98304]{0}', space=vmem, size = 0x18000, scoped, tag = 'input window, operand 4, single buffered']
    #allocation12 [shape = 'u8[4096]{0}', space=vmem, size = 0x1000, scoped, tag = 'output window, operand 0, single buffered']
    %16 = vsyncpa [#allocation7], 0
    %17 = vsyncpa [#allocation10], 0
    %18 = vsyncpa [#allocation8], 0
    // Predicated region
    $region2: #{tpu_custom_call.1} parent=1 // pred_check
      _
    $region3: #{tpu_custom_call.1} parent=1 // pred_check_branch
      %20 = sbr.rel (0) target = $region5
    $region4: #{tpu_custom_call.1} parent=1 // pred_region
      %s22 = ssub.s32 256, 256
      %23 = vsyncadd [#allocation7], %s22
      %s24 = sshll.u32 [#allocation6], 4
      %s25 = int_to_ptr.vmem [resolvable:$true] %s24
      %30 = dma.hbm_to_vmem [thread:$0]  %s1, 256, %s25, [#allocation7], 128, 128, 8
    $region5: #{tpu_custom_call.1} parent=1 // pred_fallthru
      _
    // Predicated region
    $region6: #{tpu_custom_call.1} parent=1 // pred_check
      _
    $region7: #{tpu_custom_call.1} parent=1 // pred_check_branch
      %32 = sbr.rel (0) target = $region9
    $region8: #{tpu_custom_call.1} parent=1 // pred_region
      _
    $region9: #{tpu_custom_call.1} parent=1 // pred_fallthru
      _
    // Predicated region
    $region10: #{tpu_custom_call.1} parent=1 // pred_check
      _
    $region11: #{tpu_custom_call.1} parent=1 // pred_check_branch
      %34 = sbr.rel (0) target = $region13
    $region12: #{tpu_custom_call.1} parent=1 // pred_region
      %s36 = ssub.s32 3072, 3072
      %37 = vsyncadd [#allocation10], %s36
      %s38 = sshll.u32 [#allocation9], 4
      %s39 = int_to_ptr.vmem [resolvable:$true] %s38
      %44 = dma.hbm_to_vmem [thread:$0]  %s3, 3072, %s39, [#allocation10], 384, 384, 24
    $region13: #{tpu_custom_call.1} parent=1 // pred_fallthru
      _
    // Predicated region
    $region14: #{tpu_custom_call.1} parent=1 // pred_check
      _
    $region15: #{tpu_custom_call.1} parent=1 // pred_check_branch
      %46 = sbr.rel (0) target = $region17
    $region16: #{tpu_custom_call.1} parent=1 // pred_region
      %s48 = ssub.s32 3072, 3072
      %49 = vsyncadd [#allocation10], %s48
      %s50 = sshll.u32 [#allocation11], 4
      %s51 = int_to_ptr.vmem [resolvable:$true] %s50
      %56 = dma.hbm_to_vmem [thread:$0]  %s4, 3072, %s51, [#allocation10], 384, 384, 24
    $region17: #{tpu_custom_call.1} parent=1 // pred_fallthru
      _
    // Predicated region
    $region18: #{tpu_custom_call.1} parent=1 // pred_check
      _
    $region19: #{tpu_custom_call.1} parent=1 // pred_check_branch
      %58 = sbr.rel (0) target = $region21
    $region20: #{tpu_custom_call.1} parent=1 // pred_region
      _
    $region21: #{tpu_custom_call.1} parent=1 // pred_fallthru
      _
    // Predicated region
    $region22: #{tpu_custom_call.1} parent=1 // pred_check
      _
    $region23: #{tpu_custom_call.1} parent=1 // pred_check_branch
      %60 = sbr.rel (0) target = $region25
    $region24: #{tpu_custom_call.1} parent=1 // pred_region
      _
    $region25: #{tpu_custom_call.1} parent=1 // pred_fallthru
      _
    // Predicated region
    $region26: #{tpu_custom_call.1} parent=1 // pred_check
      _
    $region27: #{tpu_custom_call.1} parent=1 // pred_check_branch
      %62 = sbr.rel (0) target = $region29
    $region28: #{tpu_custom_call.1} parent=1 // pred_region
      %63 = dma.done [#allocation7], 256
    $region29: #{tpu_custom_call.1} parent=1 // pred_fallthru
      _
    // Predicated region
    $region30: #{tpu_custom_call.1} parent=1 // pred_check
      _
    $region31: #{tpu_custom_call.1} parent=1 // pred_check_branch
      %65 = sbr.rel (0) target = $region33
    $region32: #{tpu_custom_call.1} parent=1 // pred_region
      %66 = dma.done [#allocation10], 3072
    $region33: #{tpu_custom_call.1} parent=1 // pred_fallthru
      _
    // Predicated region
    $region34: #{tpu_custom_call.1} parent=1 // pred_check
      _
    $region35: #{tpu_custom_call.1} parent=1 // pred_check_branch
      %68 = sbr.rel (0) target = $region37
    $region36: #{tpu_custom_call.1} parent=1 // pred_region
      %69 = dma.done [#allocation10], 3072
    $region37: #{tpu_custom_call.1} parent=1 // pred_fallthru
      _
    %s70 = sld [smem:[#allocation5]]
    %s71 = scalar_lea.vmem [#allocation6], %s70
    %v72 = vld [vmem:[%s71] sm:$0x1]
    %vm73 = vcmask 516096
    %74 = vst.msk [vmem:[#allocation2] sm:$0x1] %vm73, %v72
    %s75 = sld [smem:[#allocation5 + $0x1]]
    %s76 = scalar_lea.vmem [#allocation6], %s75
    %v77 = vld [vmem:[%s76] sm:$0x1]
    %78 = vst.msk [vmem:[#allocation2 + $0x1] sm:$0x1] %vm73, %v77
    %s79 = sld [smem:[#allocation5 + $0x2]]
    %s80 = scalar_lea.vmem [#allocation6], %s79
    %v81 = vld [vmem:[%s80] sm:$0x1]
    %82 = vst.msk [vmem:[#allocation2 + $0x2] sm:$0x1] %vm73, %v81
    %s83 = sld [smem:[#allocation5 + $0x3]]
    %s84 = scalar_lea.vmem [#allocation6], %s83
    %v85 = vld [vmem:[%s84] sm:$0x1]
    %86 = vst.msk [vmem:[#allocation2 + $0x3] sm:$0x1] %vm73, %v85
    %s87 = sld [smem:[#allocation5 + $0x4]]
    %s88 = scalar_lea.vmem [#allocation6], %s87
    %v89 = vld [vmem:[%s88] sm:$0x1]
    %90 = vst.msk [vmem:[#allocation2 + $0x4] sm:$0x1] %vm73, %v89
    %s91 = sld [smem:[#allocation5 + $0x5]]
    %s92 = scalar_lea.vmem [#allocation6], %s91
    %v93 = vld [vmem:[%s92] sm:$0x1]
    %94 = vst.msk [vmem:[#allocation2 + $0x5] sm:$0x1] %vm73, %v93
    %s95 = sld [smem:[#allocation5 + $0x6]]
    %s96 = scalar_lea.vmem [#allocation6], %s95
    %v97 = vld [vmem:[%s96] sm:$0x1]
    %98 = vst.msk [vmem:[#allocation2 + $0x6] sm:$0x1] %vm73, %v97
    %s99 = sld [smem:[#allocation5 + $0x7]]
    %s100 = scalar_lea.vmem [#allocation6], %s99
    %v101 = vld [vmem:[%s100] sm:$0x1]
    %102 = vst.msk [vmem:[#allocation2 + $0x7] sm:$0x1] %vm73, %v101
    %v103 = vld [vmem:[#allocation2] sm:$0xff]
    %v104 = vld [vmem:[#allocation9] sm:$0xff]
    %v105 = vld [vmem:[#allocation9 + $0x8] sm:$0xff]
    %v106 = vld [vmem:[#allocation9 + $0x10] sm:$0xff]
    %v107 = vld [vmem:[#allocation9 + $0x18] sm:$0xff]
    %v108 = vld [vmem:[#allocation9 + $0x20] sm:$0xff]
    %v109 = vld [vmem:[#allocation9 + $0x28] sm:$0xff]
    %v110 = vld [vmem:[#allocation9 + $0x30] sm:$0xff]
    %v111 = vld [vmem:[#allocation9 + $0x38] sm:$0xff]
    %v112 = vld [vmem:[#allocation9 + $0x40] sm:$0xff]
    %v113 = vld [vmem:[#allocation9 + $0x48] sm:$0xff]
    %v114 = vld [vmem:[#allocation9 + $0x50] sm:$0xff]
    %v115 = vld [vmem:[#allocation9 + $0x58] sm:$0xff]
    %v116 = vld [vmem:[#allocation9 + $0x60] sm:$0xff]
    %v117 = vld [vmem:[#allocation9 + $0x68] sm:$0xff]
    %v118 = vld [vmem:[#allocation9 + $0x70] sm:$0xff]
    %v119 = vld [vmem:[#allocation9 + $0x78] sm:$0xff]
    %v120 = vld [vmem:[#allocation9 + $0x80] sm:$0xff]
    %v121 = vld [vmem:[#allocation9 + $0x88] sm:$0xff]
    %v122 = vld [vmem:[#allocation9 + $0x90] sm:$0xff]
    %v123 = vld [vmem:[#allocation9 + $0x98] sm:$0xff]
    %v124 = vld [vmem:[#allocation9 + $0xa0] sm:$0xff]
    %v125 = vld [vmem:[#allocation9 + $0xa8] sm:$0xff]
    %v126 = vld [vmem:[#allocation9 + $0xb0] sm:$0xff]
    %v127 = vld [vmem:[#allocation9 + $0xb8] sm:$0xff]
    %v128 = vld [vmem:[%s5] sm:$0x7]
    %v130 = vlaneseq
    %v131 = vshrl.u32 %v130, 7
    %v132 = vsub.s32 0, %v131
    %v133 = vrot.slane %v128, %v132
    %v134 = vlaneseq
    %v135 = vshrl.u32 %v134, 7
    %v136 = vsub.s32 1, %v135
    %v137 = vrot.slane %v128, %v136
    %v138 = vlaneseq
    %v139 = vshrl.u32 %v138, 7
    %v140 = vsub.s32 2, %v139
    %v141 = vrot.slane %v128, %v140
    %vm145 = vcmask 523264
    %v147 = vsel %vm145, %v103, 0
    %149 = vmatprep.subr.mxu0 %v105
    %150 = vmatpush1.msra.mxu0 %v104
    %151 = vmatprep.subr.mxu0 %v108
    %152 = vmatpush1.msra.mxu0 %v107
    %153 = vmatprep.subr.mxu0 %v111
    %154 = vmatpush1.msra.mxu0 %v110
    %155 = vmatprep.subr.mxu0 %v114
    %156 = vmatpush1.msra.mxu0 %v113
    %157 = vmatprep.subr.mxu0 %v117
    %158 = vmatpush1.msra.mxu0 %v116
    %159 = vmatprep.subr.mxu0 %v120
    %160 = vmatpush1.msra.mxu0 %v119
    %161 = vmatprep.subr.mxu0 %v123
    %162 = vmatpush1.msra.mxu0 %v122
    %163 = vmatprep.subr.mxu0 %v126
    %164 = vmatpush1.msra.mxu0 %v125
    %165 = vmatprep.subr.mxu0 0.0
    %166 = vmatpush1.msra.mxu0 0.0
    %167 = vmatprep.subr.mxu0 0.0
    %168 = vmatpush1.msra.mxu0 0.0
    %169 = vmatprep.subr.mxu0 0.0
    %170 = vmatpush1.msra.mxu0 0.0
    %171 = vmatprep.subr.mxu0 0.0
    %172 = vmatpush1.msra.mxu0 0.0
    %173 = vmatprep.subr.mxu0 0.0
    %174 = vmatpush1.msra.mxu0 0.0
    %175 = vmatprep.subr.mxu0 0.0
    %176 = vmatpush1.msra.mxu0 0.0
    %177 = vmatprep.subr.mxu0 0.0
    %178 = vmatpush1.msra.mxu0 0.0
    %179 = vmatprep.subr.mxu0 0.0
    %180 = vmatpush1.msra.mxu0 0.0
    %181 = vmatprep.subr.mxu0 0.0
    %182 = vmatpush1.msra.mxu0 0.0
    %183 = vmatprep.subr.mxu0 0.0
    %184 = vmatpush1.msra.mxu0 0.0
    %185 = vmatprep.subr.mxu0 0.0
    %186 = vmatpush1.msra.mxu0 0.0
    %187 = vmatprep.subr.mxu0 0.0
    %188 = vmatpush1.msra.mxu0 0.0
    %189 = vmatprep.subr.mxu0 0.0
    %190 = vmatpush1.msra.mxu0 0.0
    %191 = vmatprep.subr.mxu0 0.0
    %192 = vmatpush1.msra.mxu0 0.0
    %193 = vmatprep.subr.mxu0 0.0
    %194 = vmatpush1.msra.mxu0 0.0
    %195 = vmatprep.subr.mxu0 0.0
    %196 = vmatpush1.msra.mxu0 0.0
    %197 = vmatprep.subr.mxu0 0.0
    %198 = vmatpush1.msra.mxu0 0.0
    %199 = vmatprep.subr.mxu0 0.0
    %200 = vmatpush1.msra.mxu0 0.0
    %201 = vmatprep.subr.mxu0 0.0
    %202 = vmatpush1.msra.mxu0 0.0
    %203 = vmatprep.subr.mxu0 0.0
    %204 = vmatpush1.msra.mxu0 0.0
    %205 = vmatprep.subr.mxu0 0.0
    %206 = vmatpush1.msra.mxu0 0.0
    %207 = vmatprep.subr.mxu0 0.0
    %208 = vmatpush1.msra.mxu0 0.0
    %209 = vmatprep.subr.mxu0 0.0
    %210 = vmatpush1.msra.mxu0 0.0
    %211 = vmatprep.subr.mxu0 0.0
    %212 = vmatpush1.msra.mxu0 0.0
    %213 = vmatprep.mubr.f32.mxu0 0.0
    %214 = vmatmul.mubr.f32.gmra.mrb[0].mxu0 %v147
    %v215 = vpop.f32.mrb[0].mxu0
    %v216 = vadd.f32 %v133, %v215
    %v217 = vpop.f32.mrb[0].mxu0
    %v218 = vadd.f32 %v137, %v217
    %219 = vdwg.mxu0
    %220 = vmatprep.subr.mxu0 0.0
    %221 = vmatpush1.msra.mxu0 %v106
    %222 = vmatprep.subr.mxu0 0.0
    %223 = vmatpush1.msra.mxu0 %v109
    %224 = vmatprep.subr.mxu0 0.0
    %225 = vmatpush1.msra.mxu0 %v112
    %226 = vmatprep.subr.mxu0 0.0
    %227 = vmatpush1.msra.mxu0 %v115
    %228 = vmatprep.subr.mxu0 0.0
    %229 = vmatpush1.msra.mxu0 %v118
    %230 = vmatprep.subr.mxu0 0.0
    %231 = vmatpush1.msra.mxu0 %v121
    %232 = vmatprep.subr.mxu0 0.0
    %233 = vmatpush1.msra.mxu0 %v124
    %234 = vmatprep.subr.mxu0 0.0
    %235 = vmatpush1.msra.mxu0 %v127
    %236 = vmatprep.subr.mxu0 0.0
    %237 = vmatpush1.msra.mxu0 0.0
    %238 = vmatprep.subr.mxu0 0.0
    %239 = vmatpush1.msra.mxu0 0.0
    %240 = vmatprep.subr.mxu0 0.0
    %241 = vmatpush1.msra.mxu0 0.0
    %242 = vmatprep.subr.mxu0 0.0
    %243 = vmatpush1.msra.mxu0 0.0
    %244 = vmatprep.subr.mxu0 0.0
    %245 = vmatpush1.msra.mxu0 0.0
    %246 = vmatprep.subr.mxu0 0.0
    %247 = vmatpush1.msra.mxu0 0.0
    %248 = vmatprep.subr.mxu0 0.0
    %249 = vmatpush1.msra.mxu0 0.0
    %250 = vmatprep.subr.mxu0 0.0
    %251 = vmatpush1.msra.mxu0 0.0
    %252 = vmatprep.subr.mxu0 0.0
    %253 = vmatpush1.msra.mxu0 0.0
    %254 = vmatprep.subr.mxu0 0.0
    %255 = vmatpush1.msra.mxu0 0.0
    %256 = vmatprep.subr.mxu0 0.0
    %257 = vmatpush1.msra.mxu0 0.0
    %258 = vmatprep.subr.mxu0 0.0
    %259 = vmatpush1.msra.mxu0 0.0
    %260 = vmatprep.subr.mxu0 0.0
    %261 = vmatpush1.msra.mxu0 0.0
    %262 = vmatprep.subr.mxu0 0.0
    %263 = vmatpush1.msra.mxu0 0.0
    %264 = vmatprep.subr.mxu0 0.0
    %265 = vmatpush1.msra.mxu0 0.0
    %266 = vmatprep.subr.mxu0 0.0
    %267 = vmatpush1.msra.mxu0 0.0
    %268 = vmatprep.subr.mxu0 0.0
    %269 = vmatpush1.msra.mxu0 0.0
    %270 = vmatprep.subr.mxu0 0.0
    %271 = vmatpush1.msra.mxu0 0.0
    %272 = vmatprep.subr.mxu0 0.0
    %273 = vmatpush1.msra.mxu0 0.0
    %274 = vmatprep.subr.mxu0 0.0
    %275 = vmatpush1.msra.mxu0 0.0
    %276 = vmatprep.subr.mxu0 0.0
    %277 = vmatpush1.msra.mxu0 0.0
    %278 = vmatprep.subr.mxu0 0.0
    %279 = vmatpush1.msra.mxu0 0.0
    %280 = vmatprep.subr.mxu0 0.0
    %281 = vmatpush1.msra.mxu0 0.0
    %282 = vmatprep.subr.mxu0 0.0
    %283 = vmatpush1.msra.mxu0 0.0
    %284 = vmatprep.mubr.f32.mxu0 0.0
    %285 = vmatmul.mubr.f32.gmra.mrb[0].mxu0 %v147
    %v286 = vpop.f32.mrb[0].mxu0
    %v287 = vadd.f32 %v141, %v286
    %v288 = vpop.f32.mrb[0].mxu0
    %289 = vdwg.mxu0
    %290 = vst [vmem:[#allocation3] sm:$0xff] %v216
    %291 = vst [vmem:[#allocation3 + $0x8] sm:$0xff] %v218
    %292 = vst [vmem:[#allocation3 + $0x10] sm:$0xff] %v287
    %v293 = vld [vmem:[#allocation11] sm:$0xff]
    %v294 = vld [vmem:[#allocation11 + $0x8] sm:$0xff]
    %v295 = vld [vmem:[#allocation11 + $0x10] sm:$0xff]
    %v296 = vld [vmem:[#allocation11 + $0x18] sm:$0xff]
    %v297 = vld [vmem:[#allocation11 + $0x20] sm:$0xff]
    %v298 = vld [vmem:[#allocation11 + $0x28] sm:$0xff]
    %v299 = vld [vmem:[#allocation11 + $0x30] sm:$0xff]
    %v300 = vld [vmem:[#allocation11 + $0x38] sm:$0xff]
    %v301 = vld [vmem:[#allocation11 + $0x40] sm:$0xff]
    %v302 = vld [vmem:[#allocation11 + $0x48] sm:$0xff]
    %v303 = vld [vmem:[#allocation11 + $0x50] sm:$0xff]
    %v304 = vld [vmem:[#allocation11 + $0x58] sm:$0xff]
    %v305 = vld [vmem:[#allocation11 + $0x60] sm:$0xff]
    %v306 = vld [vmem:[#allocation11 + $0x68] sm:$0xff]
    %v307 = vld [vmem:[#allocation11 + $0x70] sm:$0xff]
    %v308 = vld [vmem:[#allocation11 + $0x78] sm:$0xff]
    %v309 = vld [vmem:[#allocation11 + $0x80] sm:$0xff]
    %v310 = vld [vmem:[#allocation11 + $0x88] sm:$0xff]
    %v311 = vld [vmem:[#allocation11 + $0x90] sm:$0xff]
    %v312 = vld [vmem:[#allocation11 + $0x98] sm:$0xff]
    %v313 = vld [vmem:[#allocation11 + $0xa0] sm:$0xff]
    %v314 = vld [vmem:[#allocation11 + $0xa8] sm:$0xff]
    %v315 = vld [vmem:[#allocation11 + $0xb0] sm:$0xff]
    %v316 = vld [vmem:[#allocation11 + $0xb8] sm:$0xff]
    %v317 = vld [vmem:[%s6] sm:$0x7]
    %v318 = vld [vmem:[%s2] sm:$0x1]
    %v319 = vld [vmem:[#allocation3] ss:$8 sm:$0x7]
    %v321 = vlaneseq
    %v322 = vshrl.u32 %v321, 7
    %v323 = vsub.s32 0, %v322
    %v324 = vrot.slane %v317, %v323
    %v325 = vlaneseq
    %v326 = vshrl.u32 %v325, 7
    %v327 = vsub.s32 1, %v326
    %v328 = vrot.slane %v317, %v327
    %v329 = vlaneseq
    %v330 = vshrl.u32 %v329, 7
    %v331 = vsub.s32 2, %v330
    %v332 = vrot.slane %v317, %v331
    %v337 = vsel %vm145, %v318, 0
    %339 = vmatprep.subr.mxu0 %v294
    %340 = vmatpush1.msra.mxu0 %v293
    %341 = vmatprep.subr.mxu0 %v297
    %342 = vmatpush1.msra.mxu0 %v296
    %343 = vmatprep.subr.mxu0 %v300
    %344 = vmatpush1.msra.mxu0 %v299
    %345 = vmatprep.subr.mxu0 %v303
    %346 = vmatpush1.msra.mxu0 %v302
    %347 = vmatprep.subr.mxu0 %v306
    %348 = vmatpush1.msra.mxu0 %v305
    %349 = vmatprep.subr.mxu0 %v309
    %350 = vmatpush1.msra.mxu0 %v308
    %351 = vmatprep.subr.mxu0 %v312
    %352 = vmatpush1.msra.mxu0 %v311
    %353 = vmatprep.subr.mxu0 %v315
    %354 = vmatpush1.msra.mxu0 %v314
    %355 = vmatprep.subr.mxu0 0.0
    %356 = vmatpush1.msra.mxu0 0.0
    %357 = vmatprep.subr.mxu0 0.0
    %358 = vmatpush1.msra.mxu0 0.0
    %359 = vmatprep.subr.mxu0 0.0
    %360 = vmatpush1.msra.mxu0 0.0
    %361 = vmatprep.subr.mxu0 0.0
    %362 = vmatpush1.msra.mxu0 0.0
    %363 = vmatprep.subr.mxu0 0.0
    %364 = vmatpush1.msra.mxu0 0.0
    %365 = vmatprep.subr.mxu0 0.0
    %366 = vmatpush1.msra.mxu0 0.0
    %367 = vmatprep.subr.mxu0 0.0
    %368 = vmatpush1.msra.mxu0 0.0
    %369 = vmatprep.subr.mxu0 0.0
    %370 = vmatpush1.msra.mxu0 0.0
    %371 = vmatprep.subr.mxu0 0.0
    %372 = vmatpush1.msra.mxu0 0.0
    %373 = vmatprep.subr.mxu0 0.0
    %374 = vmatpush1.msra.mxu0 0.0
    %375 = vmatprep.subr.mxu0 0.0
    %376 = vmatpush1.msra.mxu0 0.0
    %377 = vmatprep.subr.mxu0 0.0
    %378 = vmatpush1.msra.mxu0 0.0
    %379 = vmatprep.subr.mxu0 0.0
    %380 = vmatpush1.msra.mxu0 0.0
    %381 = vmatprep.subr.mxu0 0.0
    %382 = vmatpush1.msra.mxu0 0.0
    %383 = vmatprep.subr.mxu0 0.0
    %384 = vmatpush1.msra.mxu0 0.0
    %385 = vmatprep.subr.mxu0 0.0
    %386 = vmatpush1.msra.mxu0 0.0
    %387 = vmatprep.subr.mxu0 0.0
    %388 = vmatpush1.msra.mxu0 0.0
    %389 = vmatprep.subr.mxu0 0.0
    %390 = vmatpush1.msra.mxu0 0.0
    %391 = vmatprep.subr.mxu0 0.0
    %392 = vmatpush1.msra.mxu0 0.0
    %393 = vmatprep.subr.mxu0 0.0
    %394 = vmatpush1.msra.mxu0 0.0
    %395 = vmatprep.subr.mxu0 0.0
    %396 = vmatpush1.msra.mxu0 0.0
    %397 = vmatprep.subr.mxu0 0.0
    %398 = vmatpush1.msra.mxu0 0.0
    %399 = vmatprep.subr.mxu0 0.0
    %400 = vmatpush1.msra.mxu0 0.0
    %401 = vmatprep.subr.mxu0 0.0
    %402 = vmatpush1.msra.mxu0 0.0
    %403 = vmatprep.mubr.f32.mxu0 0.0
    %404 = vmatmul.mubr.f32.gmra.mrb[0].mxu0 %v337
    %v405 = vpop.f32.mrb[0].mxu0
    %v406 = vadd.f32 %v324, %v405
    %v407 = vpop.f32.mrb[0].mxu0
    %v408 = vadd.f32 %v328, %v407
    %409 = vdwg.mxu0
    %410 = vmatprep.subr.mxu0 0.0
    %411 = vmatpush1.msra.mxu0 %v295
    %412 = vmatprep.subr.mxu0 0.0
    %413 = vmatpush1.msra.mxu0 %v298
    %414 = vmatprep.subr.mxu0 0.0
    %415 = vmatpush1.msra.mxu0 %v301
    %416 = vmatprep.subr.mxu0 0.0
    %417 = vmatpush1.msra.mxu0 %v304
    %418 = vmatprep.subr.mxu0 0.0
    %419 = vmatpush1.msra.mxu0 %v307
    %420 = vmatprep.subr.mxu0 0.0
    %421 = vmatpush1.msra.mxu0 %v310
    %422 = vmatprep.subr.mxu0 0.0
    %423 = vmatpush1.msra.mxu0 %v313
    %424 = vmatprep.subr.mxu0 0.0
    %425 = vmatpush1.msra.mxu0 %v316
    %426 = vmatprep.subr.mxu0 0.0
    %427 = vmatpush1.msra.mxu0 0.0
    %428 = vmatprep.subr.mxu0 0.0
    %429 = vmatpush1.msra.mxu0 0.0
    %430 = vmatprep.subr.mxu0 0.0
    %431 = vmatpush1.msra.mxu0 0.0
    %432 = vmatprep.subr.mxu0 0.0
    %433 = vmatpush1.msra.mxu0 0.0
    %434 = vmatprep.subr.mxu0 0.0
    %435 = vmatpush1.msra.mxu0 0.0
    %436 = vmatprep.subr.mxu0 0.0
    %437 = vmatpush1.msra.mxu0 0.0
    %438 = vmatprep.subr.mxu0 0.0
    %439 = vmatpush1.msra.mxu0 0.0
    %440 = vmatprep.subr.mxu0 0.0
    %441 = vmatpush1.msra.mxu0 0.0
    %442 = vmatprep.subr.mxu0 0.0
    %443 = vmatpush1.msra.mxu0 0.0
    %444 = vmatprep.subr.mxu0 0.0
    %445 = vmatpush1.msra.mxu0 0.0
    %446 = vmatprep.subr.mxu0 0.0
    %447 = vmatpush1.msra.mxu0 0.0
    %448 = vmatprep.subr.mxu0 0.0
    %449 = vmatpush1.msra.mxu0 0.0
    %450 = vmatprep.subr.mxu0 0.0
    %451 = vmatpush1.msra.mxu0 0.0
    %452 = vmatprep.subr.mxu0 0.0
    %453 = vmatpush1.msra.mxu0 0.0
    %454 = vmatprep.subr.mxu0 0.0
    %455 = vmatpush1.msra.mxu0 0.0
    %456 = vmatprep.subr.mxu0 0.0
    %457 = vmatpush1.msra.mxu0 0.0
    %458 = vmatprep.subr.mxu0 0.0
    %459 = vmatpush1.msra.mxu0 0.0
    %460 = vmatprep.subr.mxu0 0.0
    %461 = vmatpush1.msra.mxu0 0.0
    %462 = vmatprep.subr.mxu0 0.0
    %463 = vmatpush1.msra.mxu0 0.0
    %464 = vmatprep.subr.mxu0 0.0
    %465 = vmatpush1.msra.mxu0 0.0
    %466 = vmatprep.subr.mxu0 0.0
    %467 = vmatpush1.msra.mxu0 0.0
    %468 = vmatprep.subr.mxu0 0.0
    %469 = vmatpush1.msra.mxu0 0.0
    %470 = vmatprep.subr.mxu0 0.0
    %471 = vmatpush1.msra.mxu0 0.0
    %472 = vmatprep.subr.mxu0 0.0
    %473 = vmatpush1.msra.mxu0 0.0
    %474 = vmatprep.mubr.f32.mxu0 0.0
    %475 = vmatmul.mubr.f32.gmra.mrb[0].mxu0 %v337
    %v476 = vpop.f32.mrb[0].mxu0
    %v477 = vadd.f32 %v332, %v476
    %v478 = vpop.f32.mrb[0].mxu0
    %479 = vdwg.mxu0
    %v482 = vcombine.low %v406, %v408
    %v484 = vunpack.c.l.s4 1966171168
    %v485 = vunpack.c.0.s8 %v484
    %v486 = vlaneseq
    %v487 = vshrl.u32 %v486, 7
    %v488 = vsub.s32 %v485, %v487
    %v489 = vrot.slane %v482, %v488
    %v491 = vunpack.c.l.s4 1966171168
    %v492 = vunpack.c.0.s8 %v491
    %v493 = vlaneseq
    %v494 = vshrl.u32 %v493, 7
    %v495 = vsub.s32 %v492, %v494
    %v496 = vrot.slane %v489, %v495
    %v498 = vadd.f32 %v319, %v496
    %v499 = vxor.u32 %v498, 2147483648
    %v500 = vmul.f32 %v499, 1.442695
    %v501 = vpow.pop %v500
    %v502 = vadd.f32 %v501, 1.0
    %v503 = vrcp.pop %v502
    %v504 = vmul.f32 1.0, %v503
    %v505 = vmul.f32 %v504, %v477
    %v507 = vrot.slane %v319, 2
    %v509 = vadd.f32 %v507, %v505
    %v510 = vtanh.pop %v509
    %v512 = vrot.slane %v504, 1
    %v514 = vsub.f32 1.0, %v512
    %v515 = vmul.f32 %v514, %v510
    %v516 = vmul.f32 %v512, %v318
    %v517 = vadd.f32 %v515, %v516
    %518 = vst [vmem:[#allocation12] sm:$0x1] %v517
    %s519 = scalar_lea.vmem [#allocation3], 1
    %v520 = vld [vmem:[%s519] ss:$8 sm:$0x7]
    %v522 = vsel %vm145, %v517, 0
    %524 = vmatprep.subr.mxu0 %v294
    %525 = vmatpush1.msra.mxu0 %v293
    %526 = vmatprep.subr.mxu0 %v297
    %527 = vmatpush1.msra.mxu0 %v296
    %528 = vmatprep.subr.mxu0 %v300
    %529 = vmatpush1.msra.mxu0 %v299
    %530 = vmatprep.subr.mxu0 %v303
    %531 = vmatpush1.msra.mxu0 %v302
    %532 = vmatprep.subr.mxu0 %v306
    %533 = vmatpush1.msra.mxu0 %v305
    %534 = vmatprep.subr.mxu0 %v309
    %535 = vmatpush1.msra.mxu0 %v308
    %536 = vmatprep.subr.mxu0 %v312
    %537 = vmatpush1.msra.mxu0 %v311
    %538 = vmatprep.subr.mxu0 %v315
    %539 = vmatpush1.msra.mxu0 %v314
    %540 = vmatprep.subr.mxu0 0.0
    %541 = vmatpush1.msra.mxu0 0.0
    %542 = vmatprep.subr.mxu0 0.0
    %543 = vmatpush1.msra.mxu0 0.0
    %544 = vmatprep.subr.mxu0 0.0
    %545 = vmatpush1.msra.mxu0 0.0
    %546 = vmatprep.subr.mxu0 0.0
    %547 = vmatpush1.msra.mxu0 0.0
    %548 = vmatprep.subr.mxu0 0.0
    %549 = vmatpush1.msra.mxu0 0.0
    %550 = vmatprep.subr.mxu0 0.0
    %551 = vmatpush1.msra.mxu0 0.0
    %552 = vmatprep.subr.mxu0 0.0
    %553 = vmatpush1.msra.mxu0 0.0
    %554 = vmatprep.subr.mxu0 0.0
    %555 = vmatpush1.msra.mxu0 0.0
    %556 = vmatprep.subr.mxu0 0.0
    %557 = vmatpush1.msra.mxu0 0.0
    %558 = vmatprep.subr.mxu0 0.0
    %559 = vmatpush1.msra.mxu0 0.0
    %560 = vmatprep.subr.mxu0 0.0
    %561 = vmatpush1.msra.mxu0 0.0
    %562 = vmatprep.subr.mxu0 0.0
    %563 = vmatpush1.msra.mxu0 0.0
    %564 = vmatprep.subr.mxu0 0.0
    %565 = vmatpush1.msra.mxu0 0.0
    %566 = vmatprep.subr.mxu0 0.0
    %567 = vmatpush1.msra.mxu0 0.0
    %568 = vmatprep.subr.mxu0 0.0
    %569 = vmatpush1.msra.mxu0 0.0
    %570 = vmatprep.subr.mxu0 0.0
    %571 = vmatpush1.msra.mxu0 0.0
    %572 = vmatprep.subr.mxu0 0.0
    %573 = vmatpush1.msra.mxu0 0.0
    %574 = vmatprep.subr.mxu0 0.0
    %575 = vmatpush1.msra.mxu0 0.0
    %576 = vmatprep.subr.mxu0 0.0
    %577 = vmatpush1.msra.mxu0 0.0
    %578 = vmatprep.subr.mxu0 0.0
    %579 = vmatpush1.msra.mxu0 0.0
    %580 = vmatprep.subr.mxu0 0.0
    %581 = vmatpush1.msra.mxu0 0.0
    %582 = vmatprep.subr.mxu0 0.0
    %583 = vmatpush1.msra.mxu0 0.0
    %584 = vmatprep.subr.mxu0 0.0
    %585 = vmatpush1.msra.mxu0 0.0
    %586 = vmatprep.subr.mxu0 0.0
    %587 = vmatpush1.msra.mxu0 0.0
    %588 = vmatprep.mubr.f32.mxu0 0.0
    %589 = vmatmul.mubr.f32.gmra.mrb[0].mxu0 %v522
    %v590 = vpop.f32.mrb[0].mxu0
    %v591 = vadd.f32 %v324, %v590
    %v592 = vpop.f32.mrb[0].mxu0
    %v593 = vadd.f32 %v328, %v592
    %594 = vdwg.mxu0
    %595 = vmatprep.subr.mxu0 0.0
    %596 = vmatpush1.msra.mxu0 %v295
    %597 = vmatprep.subr.mxu0 0.0
    %598 = vmatpush1.msra.mxu0 %v298
    %599 = vmatprep.subr.mxu0 0.0
    %600 = vmatpush1.msra.mxu0 %v301
    %601 = vmatprep.subr.mxu0 0.0
    %602 = vmatpush1.msra.mxu0 %v304
    %603 = vmatprep.subr.mxu0 0.0
    %604 = vmatpush1.msra.mxu0 %v307
    %605 = vmatprep.subr.mxu0 0.0
    %606 = vmatpush1.msra.mxu0 %v310
    %607 = vmatprep.subr.mxu0 0.0
    %608 = vmatpush1.msra.mxu0 %v313
    %609 = vmatprep.subr.mxu0 0.0
    %610 = vmatpush1.msra.mxu0 %v316
    %611 = vmatprep.subr.mxu0 0.0
    %612 = vmatpush1.msra.mxu0 0.0
    %613 = vmatprep.subr.mxu0 0.0
    %614 = vmatpush1.msra.mxu0 0.0
    %615 = vmatprep.subr.mxu0 0.0
    %616 = vmatpush1.msra.mxu0 0.0
    %617 = vmatprep.subr.mxu0 0.0
    %618 = vmatpush1.msra.mxu0 0.0
    %619 = vmatprep.subr.mxu0 0.0
    %620 = vmatpush1.msra.mxu0 0.0
    %621 = vmatprep.subr.mxu0 0.0
    %622 = vmatpush1.msra.mxu0 0.0
    %623 = vmatprep.subr.mxu0 0.0
    %624 = vmatpush1.msra.mxu0 0.0
    %625 = vmatprep.subr.mxu0 0.0
    %626 = vmatpush1.msra.mxu0 0.0
    %627 = vmatprep.subr.mxu0 0.0
    %628 = vmatpush1.msra.mxu0 0.0
    %629 = vmatprep.subr.mxu0 0.0
    %630 = vmatpush1.msra.mxu0 0.0
    %631 = vmatprep.subr.mxu0 0.0
    %632 = vmatpush1.msra.mxu0 0.0
    %633 = vmatprep.subr.mxu0 0.0
    %634 = vmatpush1.msra.mxu0 0.0
    %635 = vmatprep.subr.mxu0 0.0
    %636 = vmatpush1.msra.mxu0 0.0
    %637 = vmatprep.subr.mxu0 0.0
    %638 = vmatpush1.msra.mxu0 0.0
    %639 = vmatprep.subr.mxu0 0.0
    %640 = vmatpush1.msra.mxu0 0.0
    %641 = vmatprep.subr.mxu0 0.0
    %642 = vmatpush1.msra.mxu0 0.0
    %643 = vmatprep.subr.mxu0 0.0
    %644 = vmatpush1.msra.mxu0 0.0
    %645 = vmatprep.subr.mxu0 0.0
    %646 = vmatpush1.msra.mxu0 0.0
    %647 = vmatprep.subr.mxu0 0.0
    %648 = vmatpush1.msra.mxu0 0.0
    %649 = vmatprep.subr.mxu0 0.0
    %650 = vmatpush1.msra.mxu0 0.0
    %651 = vmatprep.subr.mxu0 0.0
    %652 = vmatpush1.msra.mxu0 0.0
    %653 = vmatprep.subr.mxu0 0.0
    %654 = vmatpush1.msra.mxu0 0.0
    %655 = vmatprep.subr.mxu0 0.0
    %656 = vmatpush1.msra.mxu0 0.0
    %657 = vmatprep.subr.mxu0 0.0
    %658 = vmatpush1.msra.mxu0 0.0
    %659 = vmatprep.mubr.f32.mxu0 0.0
    %660 = vmatmul.mubr.f32.gmra.mrb[0].mxu0 %v522
    %v661 = vpop.f32.mrb[0].mxu0
    %v662 = vadd.f32 %v332, %v661
    %v663 = vpop.f32.mrb[0].mxu0
    %664 = vdwg.mxu0
    %v667 = vcombine.low %v591, %v593
    %v669 = vunpack.c.l.s4 1966171168
    %v670 = vunpack.c.0.s8 %v669
    %v671 = vlaneseq
    %v672 = vshrl.u32 %v671, 7
    %v673 = vsub.s32 %v670, %v672
    %v674 = vrot.slane %v667, %v673
    %v676 = vunpack.c.l.s4 1966171168
    %v677 = vunpack.c.0.s8 %v676
    %v678 = vlaneseq
    %v679 = vshrl.u32 %v678, 7
    %v680 = vsub.s32 %v677, %v679
    %v681 = vrot.slane %v674, %v680
    %v683 = vadd.f32 %v520, %v681
    %v684 = vxor.u32 %v683, 2147483648
    %v685 = vmul.f32 %v684, 1.442695
    %v686 = vpow.pop %v685
    %v687 = vadd.f32 %v686, 1.0
    %v688 = vrcp.pop %v687
    %v689 = vmul.f32 1.0, %v688
    %v690 = vmul.f32 %v689, %v662
    %v692 = vrot.slane %v520, 2
    %v694 = vadd.f32 %v692, %v690
    %v695 = vtanh.pop %v694
    %v697 = vrot.slane %v689, 1
    %v699 = vsub.f32 1.0, %v697
    %v700 = vmul.f32 %v699, %v695
    %v701 = vmul.f32 %v697, %v517
    %v702 = vadd.f32 %v700, %v701
    %703 = vst [vmem:[#allocation12 + $0x1] sm:$0x1] %v702
    %s704 = scalar_lea.vmem [#allocation3], 2
    %v705 = vld [vmem:[%s704] ss:$8 sm:$0x7]
    %v707 = vsel %vm145, %v702, 0
    %709 = vmatprep.subr.mxu0 %v294
    %710 = vmatpush1.msra.mxu0 %v293
    %711 = vmatprep.subr.mxu0 %v297
    %712 = vmatpush1.msra.mxu0 %v296
    %713 = vmatprep.subr.mxu0 %v300
    %714 = vmatpush1.msra.mxu0 %v299
    %715 = vmatprep.subr.mxu0 %v303
    %716 = vmatpush1.msra.mxu0 %v302
    %717 = vmatprep.subr.mxu0 %v306
    %718 = vmatpush1.msra.mxu0 %v305
    %719 = vmatprep.subr.mxu0 %v309
    %720 = vmatpush1.msra.mxu0 %v308
    %721 = vmatprep.subr.mxu0 %v312
    %722 = vmatpush1.msra.mxu0 %v311
    %723 = vmatprep.subr.mxu0 %v315
    %724 = vmatpush1.msra.mxu0 %v314
    %725 = vmatprep.subr.mxu0 0.0
    %726 = vmatpush1.msra.mxu0 0.0
    %727 = vmatprep.subr.mxu0 0.0
    %728 = vmatpush1.msra.mxu0 0.0
    %729 = vmatprep.subr.mxu0 0.0
    %730 = vmatpush1.msra.mxu0 0.0
    %731 = vmatprep.subr.mxu0 0.0
    %732 = vmatpush1.msra.mxu0 0.0
    %733 = vmatprep.subr.mxu0 0.0
    %734 = vmatpush1.msra.mxu0 0.0
    %735 = vmatprep.subr.mxu0 0.0
    %736 = vmatpush1.msra.mxu0 0.0
    %737 = vmatprep.subr.mxu0 0.0
    %738 = vmatpush1.msra.mxu0 0.0
    %739 = vmatprep.subr.mxu0 0.0
    %740 = vmatpush1.msra.mxu0 0.0
    %741 = vmatprep.subr.mxu0 0.0
    %742 = vmatpush1.msra.mxu0 0.0
    %743 = vmatprep.subr.mxu0 0.0
    %744 = vmatpush1.msra.mxu0 0.0
    %745 = vmatprep.subr.mxu0 0.0
    %746 = vmatpush1.msra.mxu0 0.0
    %747 = vmatprep.subr.mxu0 0.0
    %748 = vmatpush1.msra.mxu0 0.0
    %749 = vmatprep.subr.mxu0 0.0
    %750 = vmatpush1.msra.mxu0 0.0
    %751 = vmatprep.subr.mxu0 0.0
    %752 = vmatpush1.msra.mxu0 0.0
    %753 = vmatprep.subr.mxu0 0.0
    %754 = vmatpush1.msra.mxu0 0.0
    %755 = vmatprep.subr.mxu0 0.0
    %756 = vmatpush1.msra.mxu0 0.0
    %757 = vmatprep.subr.mxu0 0.0
    %758 = vmatpush1.msra.mxu0 0.0
    %759 = vmatprep.subr.mxu0 0.0
    %760 = vmatpush1.msra.mxu0 0.0
    %761 = vmatprep.subr.mxu0 0.0
    %762 = vmatpush1.msra.mxu0 0.0
    %763 = vmatprep.subr.mxu0 0.0
    %764 = vmatpush1.msra.mxu0 0.0
    %765 = vmatprep.subr.mxu0 0.0
    %766 = vmatpush1.msra.mxu0 0.0
    %767 = vmatprep.subr.mxu0 0.0
    %768 = vmatpush1.msra.mxu0 0.0
    %769 = vmatprep.subr.mxu0 0.0
    %770 = vmatpush1.msra.mxu0 0.0
    %771 = vmatprep.subr.mxu0 0.0
    %772 = vmatpush1.msra.mxu0 0.0
    %773 = vmatprep.mubr.f32.mxu0 0.0
    %774 = vmatmul.mubr.f32.gmra.mrb[0].mxu0 %v707
    %v775 = vpop.f32.mrb[0].mxu0
    %v776 = vadd.f32 %v324, %v775
    %v777 = vpop.f32.mrb[0].mxu0
    %v778 = vadd.f32 %v328, %v777
    %779 = vdwg.mxu0
    %780 = vmatprep.subr.mxu0 0.0
    %781 = vmatpush1.msra.mxu0 %v295
    %782 = vmatprep.subr.mxu0 0.0
    %783 = vmatpush1.msra.mxu0 %v298
    %784 = vmatprep.subr.mxu0 0.0
    %785 = vmatpush1.msra.mxu0 %v301
    %786 = vmatprep.subr.mxu0 0.0
    %787 = vmatpush1.msra.mxu0 %v304
    %788 = vmatprep.subr.mxu0 0.0
    %789 = vmatpush1.msra.mxu0 %v307
    %790 = vmatprep.subr.mxu0 0.0
    %791 = vmatpush1.msra.mxu0 %v310
    %792 = vmatprep.subr.mxu0 0.0
    %793 = vmatpush1.msra.mxu0 %v313
    %794 = vmatprep.subr.mxu0 0.0
    %795 = vmatpush1.msra.mxu0 %v316
    %796 = vmatprep.subr.mxu0 0.0
    %797 = vmatpush1.msra.mxu0 0.0
    %798 = vmatprep.subr.mxu0 0.0
    %799 = vmatpush1.msra.mxu0 0.0
    %800 = vmatprep.subr.mxu0 0.0
    %801 = vmatpush1.msra.mxu0 0.0
    %802 = vmatprep.subr.mxu0 0.0
    %803 = vmatpush1.msra.mxu0 0.0
    %804 = vmatprep.subr.mxu0 0.0
    %805 = vmatpush1.msra.mxu0 0.0
    %806 = vmatprep.subr.mxu0 0.0
    %807 = vmatpush1.msra.mxu0 0.0
    %808 = vmatprep.subr.mxu0 0.0
    %809 = vmatpush1.msra.mxu0 0.0
    %810 = vmatprep.subr.mxu0 0.0
    %811 = vmatpush1.msra.mxu0 0.0
    %812 = vmatprep.subr.mxu0 0.0
    %813 = vmatpush1.msra.mxu0 0.0
    %814 = vmatprep.subr.mxu0 0.0
    %815 = vmatpush1.msra.mxu0 0.0
    %816 = vmatprep.subr.mxu0 0.0
    %817 = vmatpush1.msra.mxu0 0.0
    %818 = vmatprep.subr.mxu0 0.0
    %819 = vmatpush1.msra.mxu0 0.0
    %820 = vmatprep.subr.mxu0 0.0
    %821 = vmatpush1.msra.mxu0 0.0
    %822 = vmatprep.subr.mxu0 0.0
    %823 = vmatpush1.msra.mxu0 0.0
    %824 = vmatprep.subr.mxu0 0.0
    %825 = vmatpush1.msra.mxu0 0.0
    %826 = vmatprep.subr.mxu0 0.0
    %827 = vmatpush1.msra.mxu0 0.0
    %828 = vmatprep.subr.mxu0 0.0
    %829 = vmatpush1.msra.mxu0 0.0
    %830 = vmatprep.subr.mxu0 0.0
    %831 = vmatpush1.msra.mxu0 0.0
    %832 = vmatprep.subr.mxu0 0.0
    %833 = vmatpush1.msra.mxu0 0.0
    %834 = vmatprep.subr.mxu0 0.0
    %835 = vmatpush1.msra.mxu0 0.0
    %836 = vmatprep.subr.mxu0 0.0
    %837 = vmatpush1.msra.mxu0 0.0
    %838 = vmatprep.subr.mxu0 0.0
    %839 = vmatpush1.msra.mxu0 0.0
    %840 = vmatprep.subr.mxu0 0.0
    %841 = vmatpush1.msra.mxu0 0.0
    %842 = vmatprep.subr.mxu0 0.0
    %843 = vmatpush1.msra.mxu0 0.0
    %844 = vmatprep.mubr.f32.mxu0 0.0
    %845 = vmatmul.mubr.f32.gmra.mrb[0].mxu0 %v707
    %v846 = vpop.f32.mrb[0].mxu0
    %v847 = vadd.f32 %v332, %v846
    %v848 = vpop.f32.mrb[0].mxu0
    %849 = vdwg.mxu0
    %v852 = vcombine.low %v776, %v778
    %v854 = vunpack.c.l.s4 1966171168
    %v855 = vunpack.c.0.s8 %v854
    %v856 = vlaneseq
    %v857 = vshrl.u32 %v856, 7
    %v858 = vsub.s32 %v855, %v857
    %v859 = vrot.slane %v852, %v858
    %v861 = vunpack.c.l.s4 1966171168
    %v862 = vunpack.c.0.s8 %v861
    %v863 = vlaneseq
    %v864 = vshrl.u32 %v863, 7
    %v865 = vsub.s32 %v862, %v864
    %v866 = vrot.slane %v859, %v865
    %v868 = vadd.f32 %v705, %v866
    %v869 = vxor.u32 %v868, 2147483648
    %v870 = vmul.f32 %v869, 1.442695
    %v871 = vpow.pop %v870
    %v872 = vadd.f32 %v871, 1.0
    %v873 = vrcp.pop %v872
    %v874 = vmul.f32 1.0, %v873
    %v875 = vmul.f32 %v874, %v847
    %v877 = vrot.slane %v705, 2
    %v879 = vadd.f32 %v877, %v875
    %v880 = vtanh.pop %v879
    %v882 = vrot.slane %v874, 1
    %v884 = vsub.f32 1.0, %v882
    %v885 = vmul.f32 %v884, %v880
    %v886 = vmul.f32 %v882, %v702
    %v887 = vadd.f32 %v885, %v886
    %888 = vst [vmem:[#allocation12 + $0x2] sm:$0x1] %v887
    %s889 = scalar_lea.vmem [#allocation3], 3
    %v890 = vld [vmem:[%s889] ss:$8 sm:$0x7]
    %v892 = vsel %vm145, %v887, 0
    %894 = vmatprep.subr.mxu0 %v294
    %895 = vmatpush1.msra.mxu0 %v293
    %896 = vmatprep.subr.mxu0 %v297
    %897 = vmatpush1.msra.mxu0 %v296
    %898 = vmatprep.subr.mxu0 %v300
    %899 = vmatpush1.msra.mxu0 %v299
    %900 = vmatprep.subr.mxu0 %v303
    %901 = vmatpush1.msra.mxu0 %v302
    %902 = vmatprep.subr.mxu0 %v306
    %903 = vmatpush1.msra.mxu0 %v305
    %904 = vmatprep.subr.mxu0 %v309
    %905 = vmatpush1.msra.mxu0 %v308
    %906 = vmatprep.subr.mxu0 %v312
    %907 = vmatpush1.msra.mxu0 %v311
    %908 = vmatprep.subr.mxu0 %v315
    %909 = vmatpush1.msra.mxu0 %v314
    %910 = vmatprep.subr.mxu0 0.0
    %911 = vmatpush1.msra.mxu0 0.0
    %912 = vmatprep.subr.mxu0 0.0
    %913 = vmatpush1.msra.mxu0 0.0
    %914 = vmatprep.subr.mxu0 0.0
    %915 = vmatpush1.msra.mxu0 0.0
    %916 = vmatprep.subr.mxu0 0.0
    %917 = vmatpush1.msra.mxu0 0.0
    %918 = vmatprep.subr.mxu0 0.0
    %919 = vmatpush1.msra.mxu0 0.0
    %920 = vmatprep.subr.mxu0 0.0
    %921 = vmatpush1.msra.mxu0 0.0
    %922 = vmatprep.subr.mxu0 0.0
    %923 = vmatpush1.msra.mxu0 0.0
    %924 = vmatprep.subr.mxu0 0.0
    %925 = vmatpush1.msra.mxu0 0.0
    %926 = vmatprep.subr.mxu0 0.0
    %927 = vmatpush1.msra.mxu0 0.0
    %928 = vmatprep.subr.mxu0 0.0
    %929 = vmatpush1.msra.mxu0 0.0
    %930 = vmatprep.subr.mxu0 0.0
    %931 = vmatpush1.msra.mxu0 0.0
    %932 = vmatprep.subr.mxu0 0.0
    %933 = vmatpush1.msra.mxu0 0.0
    %934 = vmatprep.subr.mxu0 0.0
    %935 = vmatpush1.msra.mxu0 0.0
    %936 = vmatprep.subr.mxu0 0.0
    %937 = vmatpush1.msra.mxu0 0.0
    %938 = vmatprep.subr.mxu0 0.0
    %939 = vmatpush1.msra.mxu0 0.0
    %940 = vmatprep.subr.mxu0 0.0
    %941 = vmatpush1.msra.mxu0 0.0
    %942 = vmatprep.subr.mxu0 0.0
    %943 = vmatpush1.msra.mxu0 0.0
    %944 = vmatprep.subr.mxu0 0.0
    %945 = vmatpush1.msra.mxu0 0.0
    %946 = vmatprep.subr.mxu0 0.0
    %947 = vmatpush1.msra.mxu0 0.0
    %948 = vmatprep.subr.mxu0 0.0
    %949 = vmatpush1.msra.mxu0 0.0
    %950 = vmatprep.subr.mxu0 0.0
    %951 = vmatpush1.msra.mxu0 0.0
    %952 = vmatprep.subr.mxu0 0.0
    %953 = vmatpush1.msra.mxu0 0.0
    %954 = vmatprep.subr.mxu0 0.0
    %955 = vmatpush1.msra.mxu0 0.0
    %956 = vmatprep.subr.mxu0 0.0
    %957 = vmatpush1.msra.mxu0 0.0
    %958 = vmatprep.mubr.f32.mxu0 0.0
    %959 = vmatmul.mubr.f32.gmra.mrb[0].mxu0 %v892
    %v960 = vpop.f32.mrb[0].mxu0
    %v961 = vadd.f32 %v324, %v960
    %v962 = vpop.f32.mrb[0].mxu0
    %v963 = vadd.f32 %v328, %v962
    %964 = vdwg.mxu0
    %965 = vmatprep.subr.mxu0 0.0
    %966 = vmatpush1.msra.mxu0 %v295
    %967 = vmatprep.subr.mxu0 0.0
    %968 = vmatpush1.msra.mxu0 %v298
    %969 = vmatprep.subr.mxu0 0.0
    %970 = vmatpush1.msra.mxu0 %v301
    %971 = vmatprep.subr.mxu0 0.0
    %972 = vmatpush1.msra.mxu0 %v304
    %973 = vmatprep.subr.mxu0 0.0
    %974 = vmatpush1.msra.mxu0 %v307
    %975 = vmatprep.subr.mxu0 0.0
    %976 = vmatpush1.msra.mxu0 %v310
    %977 = vmatprep.subr.mxu0 0.0
    %978 = vmatpush1.msra.mxu0 %v313
    %979 = vmatprep.subr.mxu0 0.0
    %980 = vmatpush1.msra.mxu0 %v316
    %981 = vmatprep.subr.mxu0 0.0
    %982 = vmatpush1.msra.mxu0 0.0
    %983 = vmatprep.subr.mxu0 0.0
    %984 = vmatpush1.msra.mxu0 0.0
    %985 = vmatprep.subr.mxu0 0.0
    %986 = vmatpush1.msra.mxu0 0.0
    %987 = vmatprep.subr.mxu0 0.0
    %988 = vmatpush1.msra.mxu0 0.0
    %989 = vmatprep.subr.mxu0 0.0
    %990 = vmatpush1.msra.mxu0 0.0
    %991 = vmatprep.subr.mxu0 0.0
    %992 = vmatpush1.msra.mxu0 0.0
    %993 = vmatprep.subr.mxu0 0.0
    %994 = vmatpush1.msra.mxu0 0.0
    %995 = vmatprep.subr.mxu0 0.0
    %996 = vmatpush1.msra.mxu0 0.0
    %997 = vmatprep.subr.mxu0 0.0
    %998 = vmatpush1.msra.mxu0 0.0
    %999 = vmatprep.subr.mxu0 0.0
    %1000 = vmatpush1.msra.mxu0 0.0
    %1001 = vmatprep.subr.mxu0 0.0
    %1002 = vmatpush1.msra.mxu0 0.0
    %1003 = vmatprep.subr.mxu0 0.0
    %1004 = vmatpush1.msra.mxu0 0.0
    %1005 = vmatprep.subr.mxu0 0.0
    %1006 = vmatpush1.msra.mxu0 0.0
    %1007 = vmatprep.subr.mxu0 0.0
    %1008 = vmatpush1.msra.mxu0 0.0
    %1009 = vmatprep.subr.mxu0 0.0
    %1010 = vmatpush1.msra.mxu0 0.0
    %1011 = vmatprep.subr.mxu0 0.0
    %1012 = vmatpush1.msra.mxu0 0.0
    %1013 = vmatprep.subr.mxu0 0.0
    %1014 = vmatpush1.msra.mxu0 0.0
    %1015 = vmatprep.subr.mxu0 0.0
    %1016 = vmatpush1.msra.mxu0 0.0
    %1017 = vmatprep.subr.mxu0 0.0
    %1018 = vmatpush1.msra.mxu0 0.0
    %1019 = vmatprep.subr.mxu0 0.0
    %1020 = vmatpush1.msra.mxu0 0.0
    %1021 = vmatprep.subr.mxu0 0.0
    %1022 = vmatpush1.msra.mxu0 0.0
    %1023 = vmatprep.subr.mxu0 0.0
    %1024 = vmatpush1.msra.mxu0 0.0
    %1025 = vmatprep.subr.mxu0 0.0
    %1026 = vmatpush1.msra.mxu0 0.0
    %1027 = vmatprep.subr.mxu0 0.0
    %1028 = vmatpush1.msra.mxu0 0.0
    %1029 = vmatprep.mubr.f32.mxu0 0.0
    %1030 = vmatmul.mubr.f32.gmra.mrb[0].mxu0 %v892
    %v1031 = vpop.f32.mrb[0].mxu0
    %v1032 = vadd.f32 %v332, %v1031
    %v1033 = vpop.f32.mrb[0].mxu0
    %1034 = vdwg.mxu0
    %v1037 = vcombine.low %v961, %v963
    %v1039 = vunpack.c.l.s4 1966171168
    %v1040 = vunpack.c.0.s8 %v1039
    %v1041 = vlaneseq
    %v1042 = vshrl.u32 %v1041, 7
    %v1043 = vsub.s32 %v1040, %v1042
    %v1044 = vrot.slane %v1037, %v1043
    %v1046 = vunpack.c.l.s4 1966171168
    %v1047 = vunpack.c.0.s8 %v1046
    %v1048 = vlaneseq
    %v1049 = vshrl.u32 %v1048, 7
    %v1050 = vsub.s32 %v1047, %v1049
    %v1051 = vrot.slane %v1044, %v1050
    %v1053 = vadd.f32 %v890, %v1051
    %v1054 = vxor.u32 %v1053, 2147483648
    %v1055 = vmul.f32 %v1054, 1.442695
    %v1056 = vpow.pop %v1055
    %v1057 = vadd.f32 %v1056, 1.0
    %v1058 = vrcp.pop %v1057
    %v1059 = vmul.f32 1.0, %v1058
    %v1060 = vmul.f32 %v1059, %v1032
    %v1062 = vrot.slane %v890, 2
    %v1064 = vadd.f32 %v1062, %v1060
    %v1065 = vtanh.pop %v1064
    %v1067 = vrot.slane %v1059, 1
    %v1069 = vsub.f32 1.0, %v1067
    %v1070 = vmul.f32 %v1069, %v1065
    %v1071 = vmul.f32 %v1067, %v887
    %v1072 = vadd.f32 %v1070, %v1071
    %1073 = vst [vmem:[#allocation12 + $0x3] sm:$0x1] %v1072
    %s1074 = scalar_lea.vmem [#allocation3], 4
    %v1075 = vld [vmem:[%s1074] ss:$8 sm:$0x7]
    %v1077 = vsel %vm145, %v1072, 0
    %1079 = vmatprep.subr.mxu0 %v294
    %1080 = vmatpush1.msra.mxu0 %v293
    %1081 = vmatprep.subr.mxu0 %v297
    %1082 = vmatpush1.msra.mxu0 %v296
    %1083 = vmatprep.subr.mxu0 %v300
    %1084 = vmatpush1.msra.mxu0 %v299
    %1085 = vmatprep.subr.mxu0 %v303
    %1086 = vmatpush1.msra.mxu0 %v302
    %1087 = vmatprep.subr.mxu0 %v306
    %1088 = vmatpush1.msra.mxu0 %v305
    %1089 = vmatprep.subr.mxu0 %v309
    %1090 = vmatpush1.msra.mxu0 %v308
    %1091 = vmatprep.subr.mxu0 %v312
    %1092 = vmatpush1.msra.mxu0 %v311
    %1093 = vmatprep.subr.mxu0 %v315
    %1094 = vmatpush1.msra.mxu0 %v314
    %1095 = vmatprep.subr.mxu0 0.0
    %1096 = vmatpush1.msra.mxu0 0.0
    %1097 = vmatprep.subr.mxu0 0.0
    %1098 = vmatpush1.msra.mxu0 0.0
    %1099 = vmatprep.subr.mxu0 0.0
    %1100 = vmatpush1.msra.mxu0 0.0
    %1101 = vmatprep.subr.mxu0 0.0
    %1102 = vmatpush1.msra.mxu0 0.0
    %1103 = vmatprep.subr.mxu0 0.0
    %1104 = vmatpush1.msra.mxu0 0.0
    %1105 = vmatprep.subr.mxu0 0.0
    %1106 = vmatpush1.msra.mxu0 0.0
    %1107 = vmatprep.subr.mxu0 0.0
    %1108 = vmatpush1.msra.mxu0 0.0
    %1109 = vmatprep.subr.mxu0 0.0
    %1110 = vmatpush1.msra.mxu0 0.0
    %1111 = vmatprep.subr.mxu0 0.0
    %1112 = vmatpush1.msra.mxu0 0.0
    %1113 = vmatprep.subr.mxu0 0.0
    %1114 = vmatpush1.msra.mxu0 0.0
    %1115 = vmatprep.subr.mxu0 0.0
    %1116 = vmatpush1.msra.mxu0 0.0
    %1117 = vmatprep.subr.mxu0 0.0
    %1118 = vmatpush1.msra.mxu0 0.0
    %1119 = vmatprep.subr.mxu0 0.0
    %1120 = vmatpush1.msra.mxu0 0.0
    %1121 = vmatprep.subr.mxu0 0.0
    %1122 = vmatpush1.msra.mxu0 0.0
    %1123 = vmatprep.subr.mxu0 0.0
    %1124 = vmatpush1.msra.mxu0 0.0
    %1125 = vmatprep.subr.mxu0 0.0
    %1126 = vmatpush1.msra.mxu0 0.0
    %1127 = vmatprep.subr.mxu0 0.0
    %1128 = vmatpush1.msra.mxu0 0.0
    %1129 = vmatprep.subr.mxu0 0.0
    %1130 = vmatpush1.msra.mxu0 0.0
    %1131 = vmatprep.subr.mxu0 0.0
    %1132 = vmatpush1.msra.mxu0 0.0
    %1133 = vmatprep.subr.mxu0 0.0
    %1134 = vmatpush1.msra.mxu0 0.0
    %1135 = vmatprep.subr.mxu0 0.0
    %1136 = vmatpush1.msra.mxu0 0.0
    %1137 = vmatprep.subr.mxu0 0.0
    %1138 = vmatpush1.msra.mxu0 0.0
    %1139 = vmatprep.subr.mxu0 0.0
    %1140 = vmatpush1.msra.mxu0 0.0
    %1141 = vmatprep.subr.mxu0 0.0
    %1142 = vmatpush1.msra.mxu0 0.0
    %1143 = vmatprep.mubr.f32.mxu0 0.0
    %1144 = vmatmul.mubr.f32.gmra.mrb[0].mxu0 %v1077
    %v1145 = vpop.f32.mrb[0].mxu0
    %v1146 = vadd.f32 %v324, %v1145
    %v1147 = vpop.f32.mrb[0].mxu0
    %v1148 = vadd.f32 %v328, %v1147
    %1149 = vdwg.mxu0
    %1150 = vmatprep.subr.mxu0 0.0
    %1151 = vmatpush1.msra.mxu0 %v295
    %1152 = vmatprep.subr.mxu0 0.0
    %1153 = vmatpush1.msra.mxu0 %v298
    %1154 = vmatprep.subr.mxu0 0.0
    %1155 = vmatpush1.msra.mxu0 %v301
    %1156 = vmatprep.subr.mxu0 0.0
    %1157 = vmatpush1.msra.mxu0 %v304
    %1158 = vmatprep.subr.mxu0 0.0
    %1159 = vmatpush1.msra.mxu0 %v307
    %1160 = vmatprep.subr.mxu0 0.0
    %1161 = vmatpush1.msra.mxu0 %v310
    %1162 = vmatprep.subr.mxu0 0.0
    %1163 = vmatpush1.msra.mxu0 %v313
    %1164 = vmatprep.subr.mxu0 0.0
    %1165 = vmatpush1.msra.mxu0 %v316
    %1166 = vmatprep.subr.mxu0 0.0
    %1167 = vmatpush1.msra.mxu0 0.0
    %1168 = vmatprep.subr.mxu0 0.0
    %1169 = vmatpush1.msra.mxu0 0.0
    %1170 = vmatprep.subr.mxu0 0.0
    %1171 = vmatpush1.msra.mxu0 0.0
    %1172 = vmatprep.subr.mxu0 0.0
    %1173 = vmatpush1.msra.mxu0 0.0
    %1174 = vmatprep.subr.mxu0 0.0
    %1175 = vmatpush1.msra.mxu0 0.0
    %1176 = vmatprep.subr.mxu0 0.0
    %1177 = vmatpush1.msra.mxu0 0.0
    %1178 = vmatprep.subr.mxu0 0.0
    %1179 = vmatpush1.msra.mxu0 0.0
    %1180 = vmatprep.subr.mxu0 0.0
    %1181 = vmatpush1.msra.mxu0 0.0
    %1182 = vmatprep.subr.mxu0 0.0
    %1183 = vmatpush1.msra.mxu0 0.0
    %1184 = vmatprep.subr.mxu0 0.0
    %1185 = vmatpush1.msra.mxu0 0.0
    %1186 = vmatprep.subr.mxu0 0.0
    %1187 = vmatpush1.msra.mxu0 0.0
    %1188 = vmatprep.subr.mxu0 0.0
    %1189 = vmatpush1.msra.mxu0 0.0
    %1190 = vmatprep.subr.mxu0 0.0
    %1191 = vmatpush1.msra.mxu0 0.0
    %1192 = vmatprep.subr.mxu0 0.0
    %1193 = vmatpush1.msra.mxu0 0.0
    %1194 = vmatprep.subr.mxu0 0.0
    %1195 = vmatpush1.msra.mxu0 0.0
    %1196 = vmatprep.subr.mxu0 0.0
    %1197 = vmatpush1.msra.mxu0 0.0
    %1198 = vmatprep.subr.mxu0 0.0
    %1199 = vmatpush1.msra.mxu0 0.0
    %1200 = vmatprep.subr.mxu0 0.0
    %1201 = vmatpush1.msra.mxu0 0.0
    %1202 = vmatprep.subr.mxu0 0.0
    %1203 = vmatpush1.msra.mxu0 0.0
    %1204 = vmatprep.subr.mxu0 0.0
    %1205 = vmatpush1.msra.mxu0 0.0
    %1206 = vmatprep.subr.mxu0 0.0
    %1207 = vmatpush1.msra.mxu0 0.0
    %1208 = vmatprep.subr.mxu0 0.0
    %1209 = vmatpush1.msra.mxu0 0.0
    %1210 = vmatprep.subr.mxu0 0.0
    %1211 = vmatpush1.msra.mxu0 0.0
    %1212 = vmatprep.subr.mxu0 0.0
    %1213 = vmatpush1.msra.mxu0 0.0
    %1214 = vmatprep.mubr.f32.mxu0 0.0
    %1215 = vmatmul.mubr.f32.gmra.mrb[0].mxu0 %v1077
    %v1216 = vpop.f32.mrb[0].mxu0
    %v1217 = vadd.f32 %v332, %v1216
    %v1218 = vpop.f32.mrb[0].mxu0
    %1219 = vdwg.mxu0
    %v1222 = vcombine.low %v1146, %v1148
    %v1224 = vunpack.c.l.s4 1966171168
    %v1225 = vunpack.c.0.s8 %v1224
    %v1226 = vlaneseq
    %v1227 = vshrl.u32 %v1226, 7
    %v1228 = vsub.s32 %v1225, %v1227
    %v1229 = vrot.slane %v1222, %v1228
    %v1231 = vunpack.c.l.s4 1966171168
    %v1232 = vunpack.c.0.s8 %v1231
    %v1233 = vlaneseq
    %v1234 = vshrl.u32 %v1233, 7
    %v1235 = vsub.s32 %v1232, %v1234
    %v1236 = vrot.slane %v1229, %v1235
    %v1238 = vadd.f32 %v1075, %v1236
    %v1239 = vxor.u32 %v1238, 2147483648
    %v1240 = vmul.f32 %v1239, 1.442695
    %v1241 = vpow.pop %v1240
    %v1242 = vadd.f32 %v1241, 1.0
    %v1243 = vrcp.pop %v1242
    %v1244 = vmul.f32 1.0, %v1243
    %v1245 = vmul.f32 %v1244, %v1217
    %v1247 = vrot.slane %v1075, 2
    %v1249 = vadd.f32 %v1247, %v1245
    %v1250 = vtanh.pop %v1249
    %v1252 = vrot.slane %v1244, 1
    %v1254 = vsub.f32 1.0, %v1252
    %v1255 = vmul.f32 %v1254, %v1250
    %v1256 = vmul.f32 %v1252, %v1072
    %v1257 = vadd.f32 %v1255, %v1256
    %1258 = vst [vmem:[#allocation12 + $0x4] sm:$0x1] %v1257
    %s1259 = scalar_lea.vmem [#allocation3], 5
    %v1260 = vld [vmem:[%s1259] ss:$8 sm:$0x7]
    %v1262 = vsel %vm145, %v1257, 0
    %1264 = vmatprep.subr.mxu0 %v294
    %1265 = vmatpush1.msra.mxu0 %v293
    %1266 = vmatprep.subr.mxu0 %v297
    %1267 = vmatpush1.msra.mxu0 %v296
    %1268 = vmatprep.subr.mxu0 %v300
    %1269 = vmatpush1.msra.mxu0 %v299
    %1270 = vmatprep.subr.mxu0 %v303
    %1271 = vmatpush1.msra.mxu0 %v302
    %1272 = vmatprep.subr.mxu0 %v306
    %1273 = vmatpush1.msra.mxu0 %v305
    %1274 = vmatprep.subr.mxu0 %v309
    %1275 = vmatpush1.msra.mxu0 %v308
    %1276 = vmatprep.subr.mxu0 %v312
    %1277 = vmatpush1.msra.mxu0 %v311
    %1278 = vmatprep.subr.mxu0 %v315
    %1279 = vmatpush1.msra.mxu0 %v314
    %1280 = vmatprep.subr.mxu0 0.0
    %1281 = vmatpush1.msra.mxu0 0.0
    %1282 = vmatprep.subr.mxu0 0.0
    %1283 = vmatpush1.msra.mxu0 0.0
    %1284 = vmatprep.subr.mxu0 0.0
    %1285 = vmatpush1.msra.mxu0 0.0
    %1286 = vmatprep.subr.mxu0 0.0
    %1287 = vmatpush1.msra.mxu0 0.0
    %1288 = vmatprep.subr.mxu0 0.0
    %1289 = vmatpush1.msra.mxu0 0.0
    %1290 = vmatprep.subr.mxu0 0.0
    %1291 = vmatpush1.msra.mxu0 0.0
    %1292 = vmatprep.subr.mxu0 0.0
    %1293 = vmatpush1.msra.mxu0 0.0
    %1294 = vmatprep.subr.mxu0 0.0
    %1295 = vmatpush1.msra.mxu0 0.0
    %1296 = vmatprep.subr.mxu0 0.0
    %1297 = vmatpush1.msra.mxu0 0.0
    %1298 = vmatprep.subr.mxu0 0.0
    %1299 = vmatpush1.msra.mxu0 0.0
    %1300 = vmatprep.subr.mxu0 0.0
    %1301 = vmatpush1.msra.mxu0 0.0
    %1302 = vmatprep.subr.mxu0 0.0
    %1303 = vmatpush1.msra.mxu0 0.0
    %1304 = vmatprep.subr.mxu0 0.0
    %1305 = vmatpush1.msra.mxu0 0.0
    %1306 = vmatprep.subr.mxu0 0.0
    %1307 = vmatpush1.msra.mxu0 0.0
    %1308 = vmatprep.subr.mxu0 0.0
    %1309 = vmatpush1.msra.mxu0 0.0
    %1310 = vmatprep.subr.mxu0 0.0
    %1311 = vmatpush1.msra.mxu0 0.0
    %1312 = vmatprep.subr.mxu0 0.0
    %1313 = vmatpush1.msra.mxu0 0.0
    %1314 = vmatprep.subr.mxu0 0.0
    %1315 = vmatpush1.msra.mxu0 0.0
    %1316 = vmatprep.subr.mxu0 0.0
    %1317 = vmatpush1.msra.mxu0 0.0
    %1318 = vmatprep.subr.mxu0 0.0
    %1319 = vmatpush1.msra.mxu0 0.0
    %1320 = vmatprep.subr.mxu0 0.0
    %1321 = vmatpush1.msra.mxu0 0.0
    %1322 = vmatprep.subr.mxu0 0.0
    %1323 = vmatpush1.msra.mxu0 0.0
    %1324 = vmatprep.subr.mxu0 0.0
    %1325 = vmatpush1.msra.mxu0 0.0
    %1326 = vmatprep.subr.mxu0 0.0
    %1327 = vmatpush1.msra.mxu0 0.0
    %1328 = vmatprep.mubr.f32.mxu0 0.0
    %1329 = vmatmul.mubr.f32.gmra.mrb[0].mxu0 %v1262
    %v1330 = vpop.f32.mrb[0].mxu0
    %v1331 = vadd.f32 %v324, %v1330
    %v1332 = vpop.f32.mrb[0].mxu0
    %v1333 = vadd.f32 %v328, %v1332
    %1334 = vdwg.mxu0
    %1335 = vmatprep.subr.mxu0 0.0
    %1336 = vmatpush1.msra.mxu0 %v295
    %1337 = vmatprep.subr.mxu0 0.0
    %1338 = vmatpush1.msra.mxu0 %v298
    %1339 = vmatprep.subr.mxu0 0.0
    %1340 = vmatpush1.msra.mxu0 %v301
    %1341 = vmatprep.subr.mxu0 0.0
    %1342 = vmatpush1.msra.mxu0 %v304
    %1343 = vmatprep.subr.mxu0 0.0
    %1344 = vmatpush1.msra.mxu0 %v307
    %1345 = vmatprep.subr.mxu0 0.0
    %1346 = vmatpush1.msra.mxu0 %v310
    %1347 = vmatprep.subr.mxu0 0.0
    %1348 = vmatpush1.msra.mxu0 %v313
    %1349 = vmatprep.subr.mxu0 0.0
    %1350 = vmatpush1.msra.mxu0 %v316
    %1351 = vmatprep.subr.mxu0 0.0
    %1352 = vmatpush1.msra.mxu0 0.0
    %1353 = vmatprep.subr.mxu0 0.0
    %1354 = vmatpush1.msra.mxu0 0.0
    %1355 = vmatprep.subr.mxu0 0.0
    %1356 = vmatpush1.msra.mxu0 0.0
    %1357 = vmatprep.subr.mxu0 0.0
    %1358 = vmatpush1.msra.mxu0 0.0
    %1359 = vmatprep.subr.mxu0 0.0
    %1360 = vmatpush1.msra.mxu0 0.0
    %1361 = vmatprep.subr.mxu0 0.0
    %1362 = vmatpush1.msra.mxu0 0.0
    %1363 = vmatprep.subr.mxu0 0.0
    %1364 = vmatpush1.msra.mxu0 0.0
    %1365 = vmatprep.subr.mxu0 0.0
    %1366 = vmatpush1.msra.mxu0 0.0
    %1367 = vmatprep.subr.mxu0 0.0
    %1368 = vmatpush1.msra.mxu0 0.0
    %1369 = vmatprep.subr.mxu0 0.0
    %1370 = vmatpush1.msra.mxu0 0.0
    %1371 = vmatprep.subr.mxu0 0.0
    %1372 = vmatpush1.msra.mxu0 0.0
    %1373 = vmatprep.subr.mxu0 0.0
    %1374 = vmatpush1.msra.mxu0 0.0
    %1375 = vmatprep.subr.mxu0 0.0
    %1376 = vmatpush1.msra.mxu0 0.0
    %1377 = vmatprep.subr.mxu0 0.0
    %1378 = vmatpush1.msra.mxu0 0.0
    %1379 = vmatprep.subr.mxu0 0.0
    %1380 = vmatpush1.msra.mxu0 0.0
    %1381 = vmatprep.subr.mxu0 0.0
    %1382 = vmatpush1.msra.mxu0 0.0
    %1383 = vmatprep.subr.mxu0 0.0
    %1384 = vmatpush1.msra.mxu0 0.0
    %1385 = vmatprep.subr.mxu0 0.0
    %1386 = vmatpush1.msra.mxu0 0.0
    %1387 = vmatprep.subr.mxu0 0.0
    %1388 = vmatpush1.msra.mxu0 0.0
    %1389 = vmatprep.subr.mxu0 0.0
    %1390 = vmatpush1.msra.mxu0 0.0
    %1391 = vmatprep.subr.mxu0 0.0
    %1392 = vmatpush1.msra.mxu0 0.0
    %1393 = vmatprep.subr.mxu0 0.0
    %1394 = vmatpush1.msra.mxu0 0.0
    %1395 = vmatprep.subr.mxu0 0.0
    %1396 = vmatpush1.msra.mxu0 0.0
    %1397 = vmatprep.subr.mxu0 0.0
    %1398 = vmatpush1.msra.mxu0 0.0
    %1399 = vmatprep.mubr.f32.mxu0 0.0
    %1400 = vmatmul.mubr.f32.gmra.mrb[0].mxu0 %v1262
    %v1401 = vpop.f32.mrb[0].mxu0
    %v1402 = vadd.f32 %v332, %v1401
    %v1403 = vpop.f32.mrb[0].mxu0
    %1404 = vdwg.mxu0
    %v1407 = vcombine.low %v1331, %v1333
    %v1409 = vunpack.c.l.s4 1966171168
    %v1410 = vunpack.c.0.s8 %v1409
    %v1411 = vlaneseq
    %v1412 = vshrl.u32 %v1411, 7
    %v1413 = vsub.s32 %v1410, %v1412
    %v1414 = vrot.slane %v1407, %v1413
    %v1416 = vunpack.c.l.s4 1966171168
    %v1417 = vunpack.c.0.s8 %v1416
    %v1418 = vlaneseq
    %v1419 = vshrl.u32 %v1418, 7
    %v1420 = vsub.s32 %v1417, %v1419
    %v1421 = vrot.slane %v1414, %v1420
    %v1423 = vadd.f32 %v1260, %v1421
    %v1424 = vxor.u32 %v1423, 2147483648
    %v1425 = vmul.f32 %v1424, 1.442695
    %v1426 = vpow.pop %v1425
    %v1427 = vadd.f32 %v1426, 1.0
    %v1428 = vrcp.pop %v1427
    %v1429 = vmul.f32 1.0, %v1428
    %v1430 = vmul.f32 %v1429, %v1402
    %v1432 = vrot.slane %v1260, 2
    %v1434 = vadd.f32 %v1432, %v1430
    %v1435 = vtanh.pop %v1434
    %v1437 = vrot.slane %v1429, 1
    %v1439 = vsub.f32 1.0, %v1437
    %v1440 = vmul.f32 %v1439, %v1435
    %v1441 = vmul.f32 %v1437, %v1257
    %v1442 = vadd.f32 %v1440, %v1441
    %1443 = vst [vmem:[#allocation12 + $0x5] sm:$0x1] %v1442
    %s1444 = scalar_lea.vmem [#allocation3], 6
    %v1445 = vld [vmem:[%s1444] ss:$8 sm:$0x7]
    %v1447 = vsel %vm145, %v1442, 0
    %1449 = vmatprep.subr.mxu0 %v294
    %1450 = vmatpush1.msra.mxu0 %v293
    %1451 = vmatprep.subr.mxu0 %v297
    %1452 = vmatpush1.msra.mxu0 %v296
    %1453 = vmatprep.subr.mxu0 %v300
    %1454 = vmatpush1.msra.mxu0 %v299
    %1455 = vmatprep.subr.mxu0 %v303
    %1456 = vmatpush1.msra.mxu0 %v302
    %1457 = vmatprep.subr.mxu0 %v306
    %1458 = vmatpush1.msra.mxu0 %v305
    %1459 = vmatprep.subr.mxu0 %v309
    %1460 = vmatpush1.msra.mxu0 %v308
    %1461 = vmatprep.subr.mxu0 %v312
    %1462 = vmatpush1.msra.mxu0 %v311
    %1463 = vmatprep.subr.mxu0 %v315
    %1464 = vmatpush1.msra.mxu0 %v314
    %1465 = vmatprep.subr.mxu0 0.0
    %1466 = vmatpush1.msra.mxu0 0.0
    %1467 = vmatprep.subr.mxu0 0.0
    %1468 = vmatpush1.msra.mxu0 0.0
    %1469 = vmatprep.subr.mxu0 0.0
    %1470 = vmatpush1.msra.mxu0 0.0
    %1471 = vmatprep.subr.mxu0 0.0
    %1472 = vmatpush1.msra.mxu0 0.0
    %1473 = vmatprep.subr.mxu0 0.0
    %1474 = vmatpush1.msra.mxu0 0.0
    %1475 = vmatprep.subr.mxu0 0.0
    %1476 = vmatpush1.msra.mxu0 0.0
    %1477 = vmatprep.subr.mxu0 0.0
    %1478 = vmatpush1.msra.mxu0 0.0
    %1479 = vmatprep.subr.mxu0 0.0
    %1480 = vmatpush1.msra.mxu0 0.0
    %1481 = vmatprep.subr.mxu0 0.0
    %1482 = vmatpush1.msra.mxu0 0.0
    %1483 = vmatprep.subr.mxu0 0.0
    %1484 = vmatpush1.msra.mxu0 0.0
    %1485 = vmatprep.subr.mxu0 0.0
    %1486 = vmatpush1.msra.mxu0 0.0
    %1487 = vmatprep.subr.mxu0 0.0
    %1488 = vmatpush1.msra.mxu0 0.0
    %1489 = vmatprep.subr.mxu0 0.0
    %1490 = vmatpush1.msra.mxu0 0.0
    %1491 = vmatprep.subr.mxu0 0.0
    %1492 = vmatpush1.msra.mxu0 0.0
    %1493 = vmatprep.subr.mxu0 0.0
    %1494 = vmatpush1.msra.mxu0 0.0
    %1495 = vmatprep.subr.mxu0 0.0
    %1496 = vmatpush1.msra.mxu0 0.0
    %1497 = vmatprep.subr.mxu0 0.0
    %1498 = vmatpush1.msra.mxu0 0.0
    %1499 = vmatprep.subr.mxu0 0.0
    %1500 = vmatpush1.msra.mxu0 0.0
    %1501 = vmatprep.subr.mxu0 0.0
    %1502 = vmatpush1.msra.mxu0 0.0
    %1503 = vmatprep.subr.mxu0 0.0
    %1504 = vmatpush1.msra.mxu0 0.0
    %1505 = vmatprep.subr.mxu0 0.0
    %1506 = vmatpush1.msra.mxu0 0.0
    %1507 = vmatprep.subr.mxu0 0.0
    %1508 = vmatpush1.msra.mxu0 0.0
    %1509 = vmatprep.subr.mxu0 0.0
    %1510 = vmatpush1.msra.mxu0 0.0
    %1511 = vmatprep.subr.mxu0 0.0
    %1512 = vmatpush1.msra.mxu0 0.0
    %1513 = vmatprep.mubr.f32.mxu0 0.0
    %1514 = vmatmul.mubr.f32.gmra.mrb[0].mxu0 %v1447
    %v1515 = vpop.f32.mrb[0].mxu0
    %v1516 = vadd.f32 %v324, %v1515
    %v1517 = vpop.f32.mrb[0].mxu0
    %v1518 = vadd.f32 %v328, %v1517
    %1519 = vdwg.mxu0
    %1520 = vmatprep.subr.mxu0 0.0
    %1521 = vmatpush1.msra.mxu0 %v295
    %1522 = vmatprep.subr.mxu0 0.0
    %1523 = vmatpush1.msra.mxu0 %v298
    %1524 = vmatprep.subr.mxu0 0.0
    %1525 = vmatpush1.msra.mxu0 %v301
    %1526 = vmatprep.subr.mxu0 0.0
    %1527 = vmatpush1.msra.mxu0 %v304
    %1528 = vmatprep.subr.mxu0 0.0
    %1529 = vmatpush1.msra.mxu0 %v307
    %1530 = vmatprep.subr.mxu0 0.0
    %1531 = vmatpush1.msra.mxu0 %v310
    %1532 = vmatprep.subr.mxu0 0.0
    %1533 = vmatpush1.msra.mxu0 %v313
    %1534 = vmatprep.subr.mxu0 0.0
    %1535 = vmatpush1.msra.mxu0 %v316
    %1536 = vmatprep.subr.mxu0 0.0
    %1537 = vmatpush1.msra.mxu0 0.0
    %1538 = vmatprep.subr.mxu0 0.0
    %1539 = vmatpush1.msra.mxu0 0.0
    %1540 = vmatprep.subr.mxu0 0.0
    %1541 = vmatpush1.msra.mxu0 0.0
    %1542 = vmatprep.subr.mxu0 0.0
    %1543 = vmatpush1.msra.mxu0 0.0
    %1544 = vmatprep.subr.mxu0 0.0
    %1545 = vmatpush1.msra.mxu0 0.0
    %1546 = vmatprep.subr.mxu0 0.0
    %1547 = vmatpush1.msra.mxu0 0.0
    %1548 = vmatprep.subr.mxu0 0.0
    %1549 = vmatpush1.msra.mxu0 0.0
    %1550 = vmatprep.subr.mxu0 0.0
    %1551 = vmatpush1.msra.mxu0 0.0
    %1552 = vmatprep.subr.mxu0 0.0
    %1553 = vmatpush1.msra.mxu0 0.0
    %1554 = vmatprep.subr.mxu0 0.0
    %1555 = vmatpush1.msra.mxu0 0.0
    %1556 = vmatprep.subr.mxu0 0.0
    %1557 = vmatpush1.msra.mxu0 0.0
    %1558 = vmatprep.subr.mxu0 0.0
    %1559 = vmatpush1.msra.mxu0 0.0
    %1560 = vmatprep.subr.mxu0 0.0
    %1561 = vmatpush1.msra.mxu0 0.0
    %1562 = vmatprep.subr.mxu0 0.0
    %1563 = vmatpush1.msra.mxu0 0.0
    %1564 = vmatprep.subr.mxu0 0.0
    %1565 = vmatpush1.msra.mxu0 0.0
    %1566 = vmatprep.subr.mxu0 0.0
    %1567 = vmatpush1.msra.mxu0 0.0
    %1568 = vmatprep.subr.mxu0 0.0
    %1569 = vmatpush1.msra.mxu0 0.0
    %1570 = vmatprep.subr.mxu0 0.0
    %1571 = vmatpush1.msra.mxu0 0.0
    %1572 = vmatprep.subr.mxu0 0.0
    %1573 = vmatpush1.msra.mxu0 0.0
    %1574 = vmatprep.subr.mxu0 0.0
    %1575 = vmatpush1.msra.mxu0 0.0
    %1576 = vmatprep.subr.mxu0 0.0
    %1577 = vmatpush1.msra.mxu0 0.0
    %1578 = vmatprep.subr.mxu0 0.0
    %1579 = vmatpush1.msra.mxu0 0.0
    %1580 = vmatprep.subr.mxu0 0.0
    %1581 = vmatpush1.msra.mxu0 0.0
    %1582 = vmatprep.subr.mxu0 0.0
    %1583 = vmatpush1.msra.mxu0 0.0
    %1584 = vmatprep.mubr.f32.mxu0 0.0
    %1585 = vmatmul.mubr.f32.gmra.mrb[0].mxu0 %v1447
    %v1586 = vpop.f32.mrb[0].mxu0
    %v1587 = vadd.f32 %v332, %v1586
    %v1588 = vpop.f32.mrb[0].mxu0
    %1589 = vdwg.mxu0
    %v1592 = vcombine.low %v1516, %v1518
    %v1594 = vunpack.c.l.s4 1966171168
    %v1595 = vunpack.c.0.s8 %v1594
    %v1596 = vlaneseq
    %v1597 = vshrl.u32 %v1596, 7
    %v1598 = vsub.s32 %v1595, %v1597
    %v1599 = vrot.slane %v1592, %v1598
    %v1601 = vunpack.c.l.s4 1966171168
    %v1602 = vunpack.c.0.s8 %v1601
    %v1603 = vlaneseq
    %v1604 = vshrl.u32 %v1603, 7
    %v1605 = vsub.s32 %v1602, %v1604
    %v1606 = vrot.slane %v1599, %v1605
    %v1608 = vadd.f32 %v1445, %v1606
    %v1609 = vxor.u32 %v1608, 2147483648
    %v1610 = vmul.f32 %v1609, 1.442695
    %v1611 = vpow.pop %v1610
    %v1612 = vadd.f32 %v1611, 1.0
    %v1613 = vrcp.pop %v1612
    %v1614 = vmul.f32 1.0, %v1613
    %v1615 = vmul.f32 %v1614, %v1587
    %v1617 = vrot.slane %v1445, 2
    %v1619 = vadd.f32 %v1617, %v1615
    %v1620 = vtanh.pop %v1619
    %v1622 = vrot.slane %v1614, 1
    %v1624 = vsub.f32 1.0, %v1622
    %v1625 = vmul.f32 %v1624, %v1620
    %v1626 = vmul.f32 %v1622, %v1442
    %v1627 = vadd.f32 %v1625, %v1626
    %1628 = vst [vmem:[#allocation12 + $0x6] sm:$0x1] %v1627
    %s1629 = scalar_lea.vmem [#allocation3], 7
    %v1630 = vld [vmem:[%s1629] ss:$8 sm:$0x7]
    %v1632 = vsel %vm145, %v1627, 0
    %1634 = vmatprep.subr.mxu0 %v294
    %1635 = vmatpush1.msra.mxu0 %v293
    %1636 = vmatprep.subr.mxu0 %v297
    %1637 = vmatpush1.msra.mxu0 %v296
    %1638 = vmatprep.subr.mxu0 %v300
    %1639 = vmatpush1.msra.mxu0 %v299
    %1640 = vmatprep.subr.mxu0 %v303
    %1641 = vmatpush1.msra.mxu0 %v302
    %1642 = vmatprep.subr.mxu0 %v306
    %1643 = vmatpush1.msra.mxu0 %v305
    %1644 = vmatprep.subr.mxu0 %v309
    %1645 = vmatpush1.msra.mxu0 %v308
    %1646 = vmatprep.subr.mxu0 %v312
    %1647 = vmatpush1.msra.mxu0 %v311
    %1648 = vmatprep.subr.mxu0 %v315
    %1649 = vmatpush1.msra.mxu0 %v314
    %1650 = vmatprep.subr.mxu0 0.0
    %1651 = vmatpush1.msra.mxu0 0.0
    %1652 = vmatprep.subr.mxu0 0.0
    %1653 = vmatpush1.msra.mxu0 0.0
    %1654 = vmatprep.subr.mxu0 0.0
    %1655 = vmatpush1.msra.mxu0 0.0
    %1656 = vmatprep.subr.mxu0 0.0
    %1657 = vmatpush1.msra.mxu0 0.0
    %1658 = vmatprep.subr.mxu0 0.0
    %1659 = vmatpush1.msra.mxu0 0.0
    %1660 = vmatprep.subr.mxu0 0.0
    %1661 = vmatpush1.msra.mxu0 0.0
    %1662 = vmatprep.subr.mxu0 0.0
    %1663 = vmatpush1.msra.mxu0 0.0
    %1664 = vmatprep.subr.mxu0 0.0
    %1665 = vmatpush1.msra.mxu0 0.0
    %1666 = vmatprep.subr.mxu0 0.0
    %1667 = vmatpush1.msra.mxu0 0.0
    %1668 = vmatprep.subr.mxu0 0.0
    %1669 = vmatpush1.msra.mxu0 0.0
    %1670 = vmatprep.subr.mxu0 0.0
    %1671 = vmatpush1.msra.mxu0 0.0
    %1672 = vmatprep.subr.mxu0 0.0
    %1673 = vmatpush1.msra.mxu0 0.0
    %1674 = vmatprep.subr.mxu0 0.0
    %1675 = vmatpush1.msra.mxu0 0.0
    %1676 = vmatprep.subr.mxu0 0.0
    %1677 = vmatpush1.msra.mxu0 0.0
    %1678 = vmatprep.subr.mxu0 0.0
    %1679 = vmatpush1.msra.mxu0 0.0
    %1680 = vmatprep.subr.mxu0 0.0
    %1681 = vmatpush1.msra.mxu0 0.0
    %1682 = vmatprep.subr.mxu0 0.0
    %1683 = vmatpush1.msra.mxu0 0.0
    %1684 = vmatprep.subr.mxu0 0.0
    %1685 = vmatpush1.msra.mxu0 0.0
    %1686 = vmatprep.subr.mxu0 0.0
    %1687 = vmatpush1.msra.mxu0 0.0
    %1688 = vmatprep.subr.mxu0 0.0
    %1689 = vmatpush1.msra.mxu0 0.0
    %1690 = vmatprep.subr.mxu0 0.0
    %1691 = vmatpush1.msra.mxu0 0.0
    %1692 = vmatprep.subr.mxu0 0.0
    %1693 = vmatpush1.msra.mxu0 0.0
    %1694 = vmatprep.subr.mxu0 0.0
    %1695 = vmatpush1.msra.mxu0 0.0
    %1696 = vmatprep.subr.mxu0 0.0
    %1697 = vmatpush1.msra.mxu0 0.0
    %1698 = vmatprep.mubr.f32.mxu0 0.0
    %1699 = vmatmul.mubr.f32.gmra.mrb[0].mxu0 %v1632
    %v1700 = vpop.f32.mrb[0].mxu0
    %v1701 = vadd.f32 %v324, %v1700
    %v1702 = vpop.f32.mrb[0].mxu0
    %v1703 = vadd.f32 %v328, %v1702
    %1704 = vdwg.mxu0
    %1705 = vmatprep.subr.mxu0 0.0
    %1706 = vmatpush1.msra.mxu0 %v295
    %1707 = vmatprep.subr.mxu0 0.0
    %1708 = vmatpush1.msra.mxu0 %v298
    %1709 = vmatprep.subr.mxu0 0.0
    %1710 = vmatpush1.msra.mxu0 %v301
    %1711 = vmatprep.subr.mxu0 0.0
    %1712 = vmatpush1.msra.mxu0 %v304
    %1713 = vmatprep.subr.mxu0 0.0
    %1714 = vmatpush1.msra.mxu0 %v307
    %1715 = vmatprep.subr.mxu0 0.0
    %1716 = vmatpush1.msra.mxu0 %v310
    %1717 = vmatprep.subr.mxu0 0.0
    %1718 = vmatpush1.msra.mxu0 %v313
    %1719 = vmatprep.subr.mxu0 0.0
    %1720 = vmatpush1.msra.mxu0 %v316
    %1721 = vmatprep.subr.mxu0 0.0
    %1722 = vmatpush1.msra.mxu0 0.0
    %1723 = vmatprep.subr.mxu0 0.0
    %1724 = vmatpush1.msra.mxu0 0.0
    %1725 = vmatprep.subr.mxu0 0.0
    %1726 = vmatpush1.msra.mxu0 0.0
    %1727 = vmatprep.subr.mxu0 0.0
    %1728 = vmatpush1.msra.mxu0 0.0
    %1729 = vmatprep.subr.mxu0 0.0
    %1730 = vmatpush1.msra.mxu0 0.0
    %1731 = vmatprep.subr.mxu0 0.0
    %1732 = vmatpush1.msra.mxu0 0.0
    %1733 = vmatprep.subr.mxu0 0.0
    %1734 = vmatpush1.msra.mxu0 0.0
    %1735 = vmatprep.subr.mxu0 0.0
    %1736 = vmatpush1.msra.mxu0 0.0
    %1737 = vmatprep.subr.mxu0 0.0
    %1738 = vmatpush1.msra.mxu0 0.0
    %1739 = vmatprep.subr.mxu0 0.0
    %1740 = vmatpush1.msra.mxu0 0.0
    %1741 = vmatprep.subr.mxu0 0.0
    %1742 = vmatpush1.msra.mxu0 0.0
    %1743 = vmatprep.subr.mxu0 0.0
    %1744 = vmatpush1.msra.mxu0 0.0
    %1745 = vmatprep.subr.mxu0 0.0
    %1746 = vmatpush1.msra.mxu0 0.0
    %1747 = vmatprep.subr.mxu0 0.0
    %1748 = vmatpush1.msra.mxu0 0.0
    %1749 = vmatprep.subr.mxu0 0.0
    %1750 = vmatpush1.msra.mxu0 0.0
    %1751 = vmatprep.subr.mxu0 0.0
    %1752 = vmatpush1.msra.mxu0 0.0
    %1753 = vmatprep.subr.mxu0 0.0
    %1754 = vmatpush1.msra.mxu0 0.0
    %1755 = vmatprep.subr.mxu0 0.0
    %1756 = vmatpush1.msra.mxu0 0.0
    %1757 = vmatprep.subr.mxu0 0.0
    %1758 = vmatpush1.msra.mxu0 0.0
    %1759 = vmatprep.subr.mxu0 0.0
    %1760 = vmatpush1.msra.mxu0 0.0
    %1761 = vmatprep.subr.mxu0 0.0
    %1762 = vmatpush1.msra.mxu0 0.0
    %1763 = vmatprep.subr.mxu0 0.0
    %1764 = vmatpush1.msra.mxu0 0.0
    %1765 = vmatprep.subr.mxu0 0.0
    %1766 = vmatpush1.msra.mxu0 0.0
    %1767 = vmatprep.subr.mxu0 0.0
    %1768 = vmatpush1.msra.mxu0 0.0
    %1769 = vmatprep.mubr.f32.mxu0 0.0
    %1770 = vmatmul.mubr.f32.gmra.mrb[0].mxu0 %v1632
    %v1771 = vpop.f32.mrb[0].mxu0
    %v1772 = vadd.f32 %v332, %v1771
    %v1773 = vpop.f32.mrb[0].mxu0
    %1774 = vdwg.mxu0
    %v1777 = vcombine.low %v1701, %v1703
    %v1779 = vunpack.c.l.s4 1966171168
    %v1780 = vunpack.c.0.s8 %v1779
    %v1781 = vlaneseq
    %v1782 = vshrl.u32 %v1781, 7
    %v1783 = vsub.s32 %v1780, %v1782
    %v1784 = vrot.slane %v1777, %v1783
    %v1786 = vunpack.c.l.s4 1966171168
    %v1787 = vunpack.c.0.s8 %v1786
    %v1788 = vlaneseq
    %v1789 = vshrl.u32 %v1788, 7
    %v1790 = vsub.s32 %v1787, %v1789
    %v1791 = vrot.slane %v1784, %v1790
    %v1793 = vadd.f32 %v1630, %v1791
    %v1794 = vxor.u32 %v1793, 2147483648
    %v1795 = vmul.f32 %v1794, 1.442695
    %v1796 = vpow.pop %v1795
    %v1797 = vadd.f32 %v1796, 1.0
    %v1798 = vrcp.pop %v1797
    %v1799 = vmul.f32 1.0, %v1798
    %v1800 = vmul.f32 %v1799, %v1772
    %v1802 = vrot.slane %v1630, 2
    %v1804 = vadd.f32 %v1802, %v1800
    %v1805 = vtanh.pop %v1804
    %v1807 = vrot.slane %v1799, 1
    %v1809 = vsub.f32 1.0, %v1807
    %v1810 = vmul.f32 %v1809, %v1805
    %v1811 = vmul.f32 %v1807, %v1627
    %v1812 = vadd.f32 %v1810, %v1811
    %1813 = vst [vmem:[#allocation12 + $0x7] sm:$0x1] %v1812
    // Predicated region
    $region38: #{tpu_custom_call.1} parent=1 // pred_check
      _
    $region39: #{tpu_custom_call.1} parent=1 // pred_check_branch
      %1815 = sbr.rel (0) target = $region41
    $region40: #{tpu_custom_call.1} parent=1 // pred_region
      %s1817 = ssub.s32 128, 128
      %1818 = vsyncadd [#allocation8], %s1817
      %s1820 = sshll.u32 [#allocation12], 4
      %s1821 = int_to_ptr.vmem [resolvable:$true] %s1820
      %1823 = dma.vmem_to_hbm [thread:$0]  %s1821, 128, %s7, [#allocation8]
    $region41: #{tpu_custom_call.1} parent=1 // pred_fallthru
      _
    // Predicated region
    $region42: #{tpu_custom_call.1} parent=1 // pred_check
      _
    $region43: #{tpu_custom_call.1} parent=1 // pred_check_branch
      %1825 = sbr.rel (0) target = $region45
    $region44: #{tpu_custom_call.1} parent=1 // pred_region
      %1826 = dma.done [#allocation8], 128
    $region45: #{tpu_custom_call.1} parent=1 // pred_fallthru
      _
    %1827 = vsyncpa [#allocation7], 1
    %1828 = vsyncpa [#allocation10], 1
    %1829 = vsyncpa [#allocation8], 1

</llo_original>
